<compile_context>
chip_gen: v7x
topology: tpu7x:2x2x1
jax: 0.10.0
libtpu: 0.0.40
codegen_flags: <defaults>
</compile_context>

<pallas_src>
import functools

import jax
import jax.numpy as jnp
from jax.experimental import pallas as pl
from jax.experimental.pallas import tpu as pltpu


LANE = 128           # TPU lane width: 4H, Epad and Lpad are padded to this.
SUBLANE = 8          # f32 sublane tile height: batch is padded to this.
NEG_PAD = -1e30      # fc bias value for padded label lanes (argmax-safe).


def _round_up(x, m):
    return ((x + m - 1) // m) * m


# ------------------------------ Pallas kernel ------------------------------ #

def lstm_fused_kernel(ids_ref, table_ref, wih_ref, whh_ref, b_ref, wfc_ref,
                      bfc_ref, out_ref, emb_ref, gates_ref, hseq_ref,
                      *, B, S, Bp):
    """Fused forward: embedding gather + input proj + LSTM recurrence + fc.

    ids_ref   : (B*S,)        int32 SMEM   token ids, row-major (b, t)
    table_ref : (V, Epad)     f32   VMEM   embedding table (cols >= E are 0)
    wih_ref   : (Epad, 4H)    bf16  VMEM   W_ih^T (rows >= E are 0), gates i,f,g,o
    whh_ref   : (H, 4H)       bf16  VMEM   W_hh^T
    b_ref     : (1, 4H)       f32   VMEM   b_ih + b_hh
    wfc_ref   : (H, Lpad)     bf16  VMEM   W_fc^T (cols >= labels are 0)
    bfc_ref   : (1, Lpad)     f32   VMEM   b_fc (cols >= labels are NEG_PAD)
    out_ref   : (S*Bp, Lpad)  f32   VMEM   logits, row = t*Bp + b
    emb_ref   : (S*Bp, Epad)  f32   VMEM scratch  gathered embeddings
    gates_ref : (S*Bp, 4H)    f32   VMEM scratch  hoisted input projection
    hseq_ref  : (S*Bp, H)     f32   VMEM scratch  h_t for every step (fc input)
    """
    H = whh_ref.shape[0]

    # ---- in-kernel embedding gather (padded batch rows stay zero) --------- #
    emb_ref[...] = jnp.zeros_like(emb_ref)
    for t in range(S):
        for b in range(B):
            tok = ids_ref[b * S + t]                          # scalar (SMEM)
            emb_ref[pl.ds(t * Bp + b, 1), :] = table_ref[pl.ds(tok, 1), :]

    # ---- hoisted input projection: ONE (S*Bp,Epad)x(Epad,4H) MXU matmul --- #
    gates_ref[...] = jnp.dot(
        emb_ref[...].astype(wih_ref.dtype), wih_ref[...],
        preferred_element_type=jnp.float32) + b_ref[...]

    whh = whh_ref[...]
    h = jnp.zeros((Bp, H), jnp.float32)
    c = jnp.zeros((Bp, H), jnp.float32)

    # ---- serial recurrence: one tiny matmul + 3 transcendentals per step -- #
    for t in range(S):
        g_lin = gates_ref[pl.ds(t * Bp, Bp), :] + jnp.dot(
            h.astype(whh.dtype), whh, preferred_element_type=jnp.float32)
        # Activations over the full 4H = 128-lane vreg, computed once each;
        # sigmoid(x) == 0.5*tanh(0.5*x) + 0.5 (exact identity, single EUP op).
        sig = 0.5 * jnp.tanh(0.5 * g_lin) + 0.5
        th = jnp.tanh(g_lin)
        i = sig[:, 0 * H:1 * H]
        f = sig[:, 1 * H:2 * H]
        g = th[:, 2 * H:3 * H]
        o = sig[:, 3 * H:4 * H]
        c = f * c + i * g
        h = o * jnp.tanh(c)
        hseq_ref[pl.ds(t * Bp, Bp), :] = h                    # tile-aligned

    # ---- hoisted fc head: ONE matmul + one dense lane-aligned store ------- #
    out_ref[...] = jnp.dot(
        hseq_ref[...].astype(wfc_ref.dtype), wfc_ref[...],
        preferred_element_type=jnp.float32) + bfc_ref[...]


# -------------------------------- wrappers --------------------------------- #

def run_lstm_fused(ids, table, w_ih_t, w_hh_t, b_lstm, w_fc_pad, b_fc_pad,
                   B, S):
    """ids: (B*S,) int32; returns padded logits (S*Bpad, Lpad) f32."""
    Bp = _round_up(max(B, SUBLANE), SUBLANE)
    H = w_hh_t.shape[0]
    Ep = table.shape[1]
    Lp = w_fc_pad.shape[1]
    vmem = pl.BlockSpec(memory_space=pltpu.MemorySpace.VMEM)
    smem = pl.BlockSpec(memory_space=pltpu.MemorySpace.SMEM)
    kernel = functools.partial(lstm_fused_kernel, B=B, S=S, Bp=Bp)
    return pl.pallas_call(
        kernel,
        out_shape=jax.ShapeDtypeStruct((S * Bp, Lp), jnp.float32),
        in_specs=[smem, vmem, vmem, vmem, vmem, vmem, vmem],
        out_specs=vmem,
        scratch_shapes=[
            pltpu.VMEM((S * Bp, Ep), jnp.float32),       # gathered embeddings
            pltpu.VMEM((S * Bp, 4 * H), jnp.float32),    # hoisted input proj
            pltpu.VMEM((S * Bp, H), jnp.float32),        # h_t sequence
        ],
        compiler_params=pltpu.CompilerParams(
            vmem_limit_bytes=32 * 1024 * 1024),
    )(ids, table, w_ih_t, w_hh_t, b_lstm, w_fc_pad, b_fc_pad)


@functools.partial(jax.jit, static_argnames=("labels",))
def lstm_forward(x_tokens, y, params, *, labels):
    """Mirrors LSTM.forward: returns (logits, y, y_hat)."""
    B, S = x_tokens.shape
    Bp = _round_up(max(B, SUBLANE), SUBLANE)
    ids = x_tokens.reshape(B * S).astype(jnp.int32)

    logits_pad = run_lstm_fused(
        ids, params["embedding"], params["w_ih_t"], params["w_hh_t"],
        params["b_lstm"], params["w_fc_pad"], params["b_fc_pad"], B, S)

    Lp = logits_pad.shape[1]
    # (S*Bp, Lpad) -> (B, S, labels): trivial slice/transpose glue; the padded
    # lanes carry -1e30 so even an argmax over padded lanes would be correct.
    logits = logits_pad.reshape(S, Bp, Lp)[:, :B, :labels]
    logits = jnp.transpose(logits, (1, 0, 2))                 # (B, S, labels)
    y_hat = jnp.argmax(logits, axis=-1)                       # (B, S)
    return logits, y, y_hat


# ----------------------------- parameter setup ----------------------------- #

def init_params(key, vocab_size, emb_dim, hidden_dim, labels):
    k_emb, k_wih, k_whh, k_bih, k_bhh, k_wfc, k_bfc = jax.random.split(key, 7)
    bound = 1.0 / (hidden_dim ** 0.5)
    u = lambda k, shape: jax.random.uniform(
        k, shape, jnp.float32, minval=-bound, maxval=bound)

    # PyTorch nn.LSTM layout: (4H, E)/(4H, H), gate order i, f, g, o.
    w_ih = u(k_wih, (4 * hidden_dim, emb_dim))
    w_hh = u(k_whh, (4 * hidden_dim, hidden_dim))
    b_ih = u(k_bih, (4 * hidden_dim,))
    b_hh = u(k_bhh, (4 * hidden_dim,))
    # nn.Linear(hidden_dim, labels)
    w_fc = u(k_wfc, (labels, hidden_dim))
    b_fc = u(k_bfc, (labels,))

    epad = _round_up(emb_dim, LANE)       # 300 -> 384 lanes
    lpad = _round_up(labels, LANE)        # 5   -> 128 lanes

    emb = jax.random.normal(k_emb, (vocab_size, emb_dim), jnp.float32)
    emb_pad = jnp.zeros((vocab_size, epad), jnp.float32).at[:, :emb_dim].set(emb)

    w_ih_t_pad = jnp.zeros((epad, 4 * hidden_dim), jnp.float32)
    w_ih_t_pad = w_ih_t_pad.at[:emb_dim, :].set(w_ih.T)

    w_fc_pad = jnp.zeros((hidden_dim, lpad), jnp.float32).at[:, :labels].set(w_fc.T)
    b_fc_pad = jnp.full((1, lpad), NEG_PAD, jnp.float32)
    b_fc_pad = b_fc_pad.at[:, :labels].set(b_fc[None, :])

    return {
        "embedding": emb_pad,                                 # (V, Epad) f32
        # MXU operands stored in bf16 (f32 accumulation inside the kernel).
        "w_ih_t": w_ih_t_pad.astype(jnp.bfloat16),            # (Epad, 4H)
        "w_hh_t": w_hh.T.astype(jnp.bfloat16),                # (H, 4H)
        "b_lstm": (b_ih + b_hh)[None, :],                     # (1, 4H) f32
        "w_fc_pad": w_fc_pad.astype(jnp.bfloat16),            # (H, Lpad)
        "b_fc_pad": b_fc_pad,                                 # (1, Lpad) f32
    }


# ------------------------- pure-JAX reference check ------------------------ #

def lstm_reference_forward(x_tokens, params, labels):
    """f32 reference LSTM (same bf16-rounded weights, f32 math throughout)."""
    x = jnp.transpose(x_tokens, (1, 0))                       # (S, B)
    emb = jnp.take(params["embedding"], x, axis=0)            # (S, B, Epad)
    wih = params["w_ih_t"].astype(jnp.float32)
    whh = params["w_hh_t"].astype(jnp.float32)
    bias = params["b_lstm"]
    S, B, _ = emb.shape
    H = whh.shape[0]
    h = jnp.zeros((B, H), jnp.float32)
    c = jnp.zeros((B, H), jnp.float32)
    hs = []
    for t in range(S):
        gates = emb[t] @ wih + bias + h @ whh
        i = jax.nn.sigmoid(gates[:, 0 * H:1 * H])
        f = jax.nn.sigmoid(gates[:, 1 * H:2 * H])
        g = jnp.tanh(gates[:, 2 * H:3 * H])
        o = jax.nn.sigmoid(gates[:, 3 * H:4 * H])
        c = f * c + i * g
        h = o * jnp.tanh(c)
        hs.append(h)
    enc = jnp.stack(hs, axis=0)                               # (S, B, H)
    wfc = params["w_fc_pad"].astype(jnp.float32)[:, :labels]
    bfc = params["b_fc_pad"][0, :labels]
    logits = jnp.einsum("sbh,hl->sbl", enc, wfc) + bfc
    return jnp.transpose(logits, (1, 0, 2))                   # (B, S, labels)


# ---------------------------------- main ----------------------------------- #

if __name__ == "__main__":
    # config equivalent: model='LSTM' (unidirectional), layers=1, hidden_dim=32
    VOCAB, EMB, HIDDEN, LABELS = 50, 300, 32, 5
    BATCH, SEQ = 2, 8

    key = jax.random.PRNGKey(0)
    k_params, k_x, k_y = jax.random.split(key, 3)

    params = init_params(k_params, VOCAB, EMB, HIDDEN, LABELS)
    x_tokens = jax.random.randint(k_x, (BATCH, SEQ), 0, VOCAB, dtype=jnp.int32)
    y = jax.random.randint(k_y, (BATCH,), 0, LABELS, dtype=jnp.int32)

    logits, y_out, y_hat = lstm_forward(x_tokens, y, params, labels=LABELS)
    jax.block_until_ready((logits, y_out, y_hat))

    assert logits.shape == (BATCH, SEQ, LABELS)
    assert y_hat.shape == (BATCH, SEQ)
    assert y_out.shape == (BATCH,)

    # Tolerance check against an f32 reference (bf16 MXU operands in-kernel).
    ref_logits = lstm_reference_forward(x_tokens, params, LABELS)
    max_err = float(jnp.max(jnp.abs(logits - ref_logits)))
    assert max_err < 5e-2, f"max abs logits error {max_err}"

    print("KERNEL_OK")
</pallas_src>

<mosaic_0001>
module attributes {stable_mosaic.version = 11 : i64} {
  func.func @lstm_fused_kernel(%arg0: memref<16xi32, #tpu.memory_space<smem>>, %arg1: memref<50x384xf32, #tpu.memory_space<vmem>>, %arg2: memref<384x128xbf16, #tpu.memory_space<vmem>>, %arg3: memref<32x128xbf16, #tpu.memory_space<vmem>>, %arg4: memref<1x128xf32, #tpu.memory_space<vmem>>, %arg5: memref<32x128xbf16, #tpu.memory_space<vmem>>, %arg6: memref<1x128xf32, #tpu.memory_space<vmem>>, %arg7: memref<64x128xf32, #tpu.memory_space<vmem>>, %arg8: memref<64x384xf32, #tpu.memory_space<vmem>>, %arg9: memref<64x128xf32, #tpu.memory_space<vmem>>, %arg10: memref<64x32xf32, #tpu.memory_space<vmem>>) attributes {dimension_semantics = [], scalar_prefetch = 0 : i64, scratch_operands = 3 : i64, tpu.core_type = #tpu.core_type<tc>} {
    %cst = arith.constant 0.000000e+00 : f32
    %0 = vector.broadcast %cst : f32 to vector<64x384xf32>
    %c0 = arith.constant 0 : index
    %c0_0 = arith.constant 0 : index
    %1 = vector.load %arg8[%c0, %c0_0] : memref<64x384xf32, #tpu.memory_space<vmem>>, vector<64x384xf32>
    tpu.vector_store %arg8[%c0, %c0_0], %0 {strides = array<i32>} : memref<64x384xf32, #tpu.memory_space<vmem>>, vector<64x384xf32>,
    %c0_1 = arith.constant 0 : index
    %2 = memref.load %arg0[%c0_1] : memref<16xi32, #tpu.memory_space<smem>>
    %3 = arith.index_cast %2 : i32 to index
    %c0_2 = arith.constant 0 : index
    %4 = vector.load %arg1[%3, %c0_2] : memref<50x384xf32, #tpu.memory_space<vmem>>, vector<1x384xf32>
    %c0_3 = arith.constant 0 : index
    %c0_4 = arith.constant 0 : index
    %5 = vector.load %arg8[%c0_3, %c0_4] : memref<64x384xf32, #tpu.memory_space<vmem>>, vector<1x384xf32>
    tpu.vector_store %arg8[%c0_3, %c0_4], %4 {strides = array<i32>} : memref<64x384xf32, #tpu.memory_space<vmem>>, vector<1x384xf32>,
    %c8 = arith.constant 8 : index
    %6 = memref.load %arg0[%c8] : memref<16xi32, #tpu.memory_space<smem>>
    %7 = arith.index_cast %6 : i32 to index
    %c0_5 = arith.constant 0 : index
    %8 = vector.load %arg1[%7, %c0_5] : memref<50x384xf32, #tpu.memory_space<vmem>>, vector<1x384xf32>
    %c1 = arith.constant 1 : index
    %c0_6 = arith.constant 0 : index
    %9 = vector.load %arg8[%c1, %c0_6] : memref<64x384xf32, #tpu.memory_space<vmem>>, vector<1x384xf32>
    tpu.vector_store %arg8[%c1, %c0_6], %8 {strides = array<i32>} : memref<64x384xf32, #tpu.memory_space<vmem>>, vector<1x384xf32>,
    %c1_7 = arith.constant 1 : index
    %10 = memref.load %arg0[%c1_7] : memref<16xi32, #tpu.memory_space<smem>>
    %11 = arith.index_cast %10 : i32 to index
    %c0_8 = arith.constant 0 : index
    %12 = vector.load %arg1[%11, %c0_8] : memref<50x384xf32, #tpu.memory_space<vmem>>, vector<1x384xf32>
    %c8_9 = arith.constant 8 : index
    %c0_10 = arith.constant 0 : index
    %13 = vector.load %arg8[%c8_9, %c0_10] : memref<64x384xf32, #tpu.memory_space<vmem>>, vector<1x384xf32>
    tpu.vector_store %arg8[%c8_9, %c0_10], %12 {strides = array<i32>} : memref<64x384xf32, #tpu.memory_space<vmem>>, vector<1x384xf32>,
    %c9 = arith.constant 9 : index
    %14 = memref.load %arg0[%c9] : memref<16xi32, #tpu.memory_space<smem>>
    %15 = arith.index_cast %14 : i32 to index
    %c0_11 = arith.constant 0 : index
    %16 = vector.load %arg1[%15, %c0_11] : memref<50x384xf32, #tpu.memory_space<vmem>>, vector<1x384xf32>
    %c9_12 = arith.constant 9 : index
    %c0_13 = arith.constant 0 : index
    %17 = vector.load %arg8[%c9_12, %c0_13] : memref<64x384xf32, #tpu.memory_space<vmem>>, vector<1x384xf32>
    tpu.vector_store %arg8[%c9_12, %c0_13], %16 {strides = array<i32>} : memref<64x384xf32, #tpu.memory_space<vmem>>, vector<1x384xf32>,
    %c2 = arith.constant 2 : index
    %18 = memref.load %arg0[%c2] : memref<16xi32, #tpu.memory_space<smem>>
    %19 = arith.index_cast %18 : i32 to index
    %c0_14 = arith.constant 0 : index
    %20 = vector.load %arg1[%19, %c0_14] : memref<50x384xf32, #tpu.memory_space<vmem>>, vector<1x384xf32>
    %c16 = arith.constant 16 : index
    %c0_15 = arith.constant 0 : index
    %21 = vector.load %arg8[%c16, %c0_15] : memref<64x384xf32, #tpu.memory_space<vmem>>, vector<1x384xf32>
    tpu.vector_store %arg8[%c16, %c0_15], %20 {strides = array<i32>} : memref<64x384xf32, #tpu.memory_space<vmem>>, vector<1x384xf32>,
    %c10 = arith.constant 10 : index
    %22 = memref.load %arg0[%c10] : memref<16xi32, #tpu.memory_space<smem>>
    %23 = arith.index_cast %22 : i32 to index
    %c0_16 = arith.constant 0 : index
    %24 = vector.load %arg1[%23, %c0_16] : memref<50x384xf32, #tpu.memory_space<vmem>>, vector<1x384xf32>
    %c17 = arith.constant 17 : index
    %c0_17 = arith.constant 0 : index
    %25 = vector.load %arg8[%c17, %c0_17] : memref<64x384xf32, #tpu.memory_space<vmem>>, vector<1x384xf32>
    tpu.vector_store %arg8[%c17, %c0_17], %24 {strides = array<i32>} : memref<64x384xf32, #tpu.memory_space<vmem>>, vector<1x384xf32>,
    %c3 = arith.constant 3 : index
    %26 = memref.load %arg0[%c3] : memref<16xi32, #tpu.memory_space<smem>>
    %27 = arith.index_cast %26 : i32 to index
    %c0_18 = arith.constant 0 : index
    %28 = vector.load %arg1[%27, %c0_18] : memref<50x384xf32, #tpu.memory_space<vmem>>, vector<1x384xf32>
    %c24 = arith.constant 24 : index
    %c0_19 = arith.constant 0 : index
    %29 = vector.load %arg8[%c24, %c0_19] : memref<64x384xf32, #tpu.memory_space<vmem>>, vector<1x384xf32>
    tpu.vector_store %arg8[%c24, %c0_19], %28 {strides = array<i32>} : memref<64x384xf32, #tpu.memory_space<vmem>>, vector<1x384xf32>,
    %c11 = arith.constant 11 : index
    %30 = memref.load %arg0[%c11] : memref<16xi32, #tpu.memory_space<smem>>
    %31 = arith.index_cast %30 : i32 to index
    %c0_20 = arith.constant 0 : index
    %32 = vector.load %arg1[%31, %c0_20] : memref<50x384xf32, #tpu.memory_space<vmem>>, vector<1x384xf32>
    %c25 = arith.constant 25 : index
    %c0_21 = arith.constant 0 : index
    %33 = vector.load %arg8[%c25, %c0_21] : memref<64x384xf32, #tpu.memory_space<vmem>>, vector<1x384xf32>
    tpu.vector_store %arg8[%c25, %c0_21], %32 {strides = array<i32>} : memref<64x384xf32, #tpu.memory_space<vmem>>, vector<1x384xf32>,
    %c4 = arith.constant 4 : index
    %34 = memref.load %arg0[%c4] : memref<16xi32, #tpu.memory_space<smem>>
    %35 = arith.index_cast %34 : i32 to index
    %c0_22 = arith.constant 0 : index
    %36 = vector.load %arg1[%35, %c0_22] : memref<50x384xf32, #tpu.memory_space<vmem>>, vector<1x384xf32>
    %c32 = arith.constant 32 : index
    %c0_23 = arith.constant 0 : index
    %37 = vector.load %arg8[%c32, %c0_23] : memref<64x384xf32, #tpu.memory_space<vmem>>, vector<1x384xf32>
    tpu.vector_store %arg8[%c32, %c0_23], %36 {strides = array<i32>} : memref<64x384xf32, #tpu.memory_space<vmem>>, vector<1x384xf32>,
    %c12 = arith.constant 12 : index
    %38 = memref.load %arg0[%c12] : memref<16xi32, #tpu.memory_space<smem>>
    %39 = arith.index_cast %38 : i32 to index
    %c0_24 = arith.constant 0 : index
    %40 = vector.load %arg1[%39, %c0_24] : memref<50x384xf32, #tpu.memory_space<vmem>>, vector<1x384xf32>
    %c33 = arith.constant 33 : index
    %c0_25 = arith.constant 0 : index
    %41 = vector.load %arg8[%c33, %c0_25] : memref<64x384xf32, #tpu.memory_space<vmem>>, vector<1x384xf32>
    tpu.vector_store %arg8[%c33, %c0_25], %40 {strides = array<i32>} : memref<64x384xf32, #tpu.memory_space<vmem>>, vector<1x384xf32>,
    %c5 = arith.constant 5 : index
    %42 = memref.load %arg0[%c5] : memref<16xi32, #tpu.memory_space<smem>>
    %43 = arith.index_cast %42 : i32 to index
    %c0_26 = arith.constant 0 : index
    %44 = vector.load %arg1[%43, %c0_26] : memref<50x384xf32, #tpu.memory_space<vmem>>, vector<1x384xf32>
    %c40 = arith.constant 40 : index
    %c0_27 = arith.constant 0 : index
    %45 = vector.load %arg8[%c40, %c0_27] : memref<64x384xf32, #tpu.memory_space<vmem>>, vector<1x384xf32>
    tpu.vector_store %arg8[%c40, %c0_27], %44 {strides = array<i32>} : memref<64x384xf32, #tpu.memory_space<vmem>>, vector<1x384xf32>,
    %c13 = arith.constant 13 : index
    %46 = memref.load %arg0[%c13] : memref<16xi32, #tpu.memory_space<smem>>
    %47 = arith.index_cast %46 : i32 to index
    %c0_28 = arith.constant 0 : index
    %48 = vector.load %arg1[%47, %c0_28] : memref<50x384xf32, #tpu.memory_space<vmem>>, vector<1x384xf32>
    %c41 = arith.constant 41 : index
    %c0_29 = arith.constant 0 : index
    %49 = vector.load %arg8[%c41, %c0_29] : memref<64x384xf32, #tpu.memory_space<vmem>>, vector<1x384xf32>
    tpu.vector_store %arg8[%c41, %c0_29], %48 {strides = array<i32>} : memref<64x384xf32, #tpu.memory_space<vmem>>, vector<1x384xf32>,
    %c6 = arith.constant 6 : index
    %50 = memref.load %arg0[%c6] : memref<16xi32, #tpu.memory_space<smem>>
    %51 = arith.index_cast %50 : i32 to index
    %c0_30 = arith.constant 0 : index
    %52 = vector.load %arg1[%51, %c0_30] : memref<50x384xf32, #tpu.memory_space<vmem>>, vector<1x384xf32>
    %c48 = arith.constant 48 : index
    %c0_31 = arith.constant 0 : index
    %53 = vector.load %arg8[%c48, %c0_31] : memref<64x384xf32, #tpu.memory_space<vmem>>, vector<1x384xf32>
    tpu.vector_store %arg8[%c48, %c0_31], %52 {strides = array<i32>} : memref<64x384xf32, #tpu.memory_space<vmem>>, vector<1x384xf32>,
    %c14 = arith.constant 14 : index
    %54 = memref.load %arg0[%c14] : memref<16xi32, #tpu.memory_space<smem>>
    %55 = arith.index_cast %54 : i32 to index
    %c0_32 = arith.constant 0 : index
    %56 = vector.load %arg1[%55, %c0_32] : memref<50x384xf32, #tpu.memory_space<vmem>>, vector<1x384xf32>
    %c49 = arith.constant 49 : index
    %c0_33 = arith.constant 0 : index
    %57 = vector.load %arg8[%c49, %c0_33] : memref<64x384xf32, #tpu.memory_space<vmem>>, vector<1x384xf32>
    tpu.vector_store %arg8[%c49, %c0_33], %56 {strides = array<i32>} : memref<64x384xf32, #tpu.memory_space<vmem>>, vector<1x384xf32>,
    %c7 = arith.constant 7 : index
    %58 = memref.load %arg0[%c7] : memref<16xi32, #tpu.memory_space<smem>>
    %59 = arith.index_cast %58 : i32 to index
    %c0_34 = arith.constant 0 : index
    %60 = vector.load %arg1[%59, %c0_34] : memref<50x384xf32, #tpu.memory_space<vmem>>, vector<1x384xf32>
    %c56 = arith.constant 56 : index
    %c0_35 = arith.constant 0 : index
    %61 = vector.load %arg8[%c56, %c0_35] : memref<64x384xf32, #tpu.memory_space<vmem>>, vector<1x384xf32>
    tpu.vector_store %arg8[%c56, %c0_35], %60 {strides = array<i32>} : memref<64x384xf32, #tpu.memory_space<vmem>>, vector<1x384xf32>,
    %c15 = arith.constant 15 : index
    %62 = memref.load %arg0[%c15] : memref<16xi32, #tpu.memory_space<smem>>
    %63 = arith.index_cast %62 : i32 to index
    %c0_36 = arith.constant 0 : index
    %64 = vector.load %arg1[%63, %c0_36] : memref<50x384xf32, #tpu.memory_space<vmem>>, vector<1x384xf32>
    %c57 = arith.constant 57 : index
    %c0_37 = arith.constant 0 : index
    %65 = vector.load %arg8[%c57, %c0_37] : memref<64x384xf32, #tpu.memory_space<vmem>>, vector<1x384xf32>
    tpu.vector_store %arg8[%c57, %c0_37], %64 {strides = array<i32>} : memref<64x384xf32, #tpu.memory_space<vmem>>, vector<1x384xf32>,
    %c0_38 = arith.constant 0 : index
    %c0_39 = arith.constant 0 : index
    %66 = vector.load %arg8[%c0_38, %c0_39] : memref<64x384xf32, #tpu.memory_space<vmem>>, vector<64x384xf32>
    %67 = arith.truncf %66 : vector<64x384xf32> to vector<64x384xbf16>
    %c0_40 = arith.constant 0 : index
    %c0_41 = arith.constant 0 : index
    %68 = vector.load %arg2[%c0_40, %c0_41] : memref<384x128xbf16, #tpu.memory_space<vmem>>, vector<384x128xbf16>
    %cst_42 = arith.constant dense<0.000000e+00> : vector<64x128xf32>
    %69 = tpu.matmul %67, %68, %cst_42 {dimension_numbers = #tpu.dot_dimension_numbers<[1], [0], [0], [1], [0, 0, 1, 1], [], []>} : vector<64x384xbf16>, vector<384x128xbf16>, vector<64x128xf32> -> vector<64x128xf32>
    %c0_43 = arith.constant 0 : index
    %c0_44 = arith.constant 0 : index
    %70 = vector.load %arg4[%c0_43, %c0_44] : memref<1x128xf32, #tpu.memory_space<vmem>>, vector<1x128xf32>
    %71 = vector.broadcast %70 : vector<1x128xf32> to vector<64x128xf32>
    %72 = arith.addf %69, %71 : vector<64x128xf32>
    %c0_45 = arith.constant 0 : index
    %c0_46 = arith.constant 0 : index
    %73 = vector.load %arg9[%c0_45, %c0_46] : memref<64x128xf32, #tpu.memory_space<vmem>>, vector<64x128xf32>
    tpu.vector_store %arg9[%c0_45, %c0_46], %72 {strides = array<i32>} : memref<64x128xf32, #tpu.memory_space<vmem>>, vector<64x128xf32>,
    %c0_47 = arith.constant 0 : index
    %c0_48 = arith.constant 0 : index
    %74 = vector.load %arg3[%c0_47, %c0_48] : memref<32x128xbf16, #tpu.memory_space<vmem>>, vector<32x128xbf16>
    %cst_49 = arith.constant 0.000000e+00 : f32
    %75 = vector.broadcast %cst_49 : f32 to vector<8x32xf32>
    %cst_50 = arith.constant 0.000000e+00 : f32
    %76 = vector.broadcast %cst_50 : f32 to vector<8x32xf32>
    %c0_51 = arith.constant 0 : index
    %c0_52 = arith.constant 0 : index
    %77 = vector.load %arg9[%c0_51, %c0_52] : memref<64x128xf32, #tpu.memory_space<vmem>>, vector<8x128xf32>
    %78 = arith.truncf %75 : vector<8x32xf32> to vector<8x32xbf16>
    %cst_53 = arith.constant dense<0.000000e+00> : vector<8x128xf32>
    %79 = tpu.matmul %78, %74, %cst_53 {dimension_numbers = #tpu.dot_dimension_numbers<[1], [0], [0], [1], [0, 0, 1, 1], [], []>} : vector<8x32xbf16>, vector<32x128xbf16>, vector<8x128xf32> -> vector<8x128xf32>
    %80 = arith.addf %77, %79 : vector<8x128xf32>
    %cst_54 = arith.constant 5.000000e-01 : f32
    %81 = vector.broadcast %cst_54 : f32 to vector<8x128xf32>
    %82 = arith.mulf %81, %80 : vector<8x128xf32>
    %83 = math.tanh %82 : vector<8x128xf32>
    %cst_55 = arith.constant 5.000000e-01 : f32
    %84 = vector.broadcast %cst_55 : f32 to vector<8x128xf32>
    %85 = arith.mulf %84, %83 : vector<8x128xf32>
    %cst_56 = arith.constant 5.000000e-01 : f32
    %86 = vector.broadcast %cst_56 : f32 to vector<8x128xf32>
    %87 = arith.addf %85, %86 : vector<8x128xf32>
    %88 = math.tanh %80 : vector<8x128xf32>
    %89 = vector.extract_strided_slice %87 {offsets = [0, 0], sizes = [8, 32], strides = [1, 1]} : vector<8x128xf32> to vector<8x32xf32>
    %90 = vector.extract_strided_slice %87 {offsets = [0, 32], sizes = [8, 32], strides = [1, 1]} : vector<8x128xf32> to vector<8x32xf32>
    %91 = vector.extract_strided_slice %88 {offsets = [0, 64], sizes = [8, 32], strides = [1, 1]} : vector<8x128xf32> to vector<8x32xf32>
    %92 = vector.extract_strided_slice %87 {offsets = [0, 96], sizes = [8, 32], strides = [1, 1]} : vector<8x128xf32> to vector<8x32xf32>
    %93 = arith.mulf %90, %76 : vector<8x32xf32>
    %94 = arith.mulf %89, %91 : vector<8x32xf32>
    %95 = arith.addf %93, %94 : vector<8x32xf32>
    %96 = math.tanh %95 : vector<8x32xf32>
    %97 = arith.mulf %92, %96 : vector<8x32xf32>
    %c0_57 = arith.constant 0 : index
    %c0_58 = arith.constant 0 : index
    %98 = vector.load %arg10[%c0_57, %c0_58] : memref<64x32xf32, #tpu.memory_space<vmem>>, vector<8x32xf32>
    tpu.vector_store %arg10[%c0_57, %c0_58], %97 {strides = array<i32>} : memref<64x32xf32, #tpu.memory_space<vmem>>, vector<8x32xf32>,
    %c8_59 = arith.constant 8 : index
    %c0_60 = arith.constant 0 : index
    %99 = vector.load %arg9[%c8_59, %c0_60] : memref<64x128xf32, #tpu.memory_space<vmem>>, vector<8x128xf32>
    %100 = arith.truncf %97 : vector<8x32xf32> to vector<8x32xbf16>
    %cst_61 = arith.constant dense<0.000000e+00> : vector<8x128xf32>
    %101 = tpu.matmul %100, %74, %cst_61 {dimension_numbers = #tpu.dot_dimension_numbers<[1], [0], [0], [1], [0, 0, 1, 1], [], []>} : vector<8x32xbf16>, vector<32x128xbf16>, vector<8x128xf32> -> vector<8x128xf32>
    %102 = arith.addf %99, %101 : vector<8x128xf32>
    %cst_62 = arith.constant 5.000000e-01 : f32
    %103 = vector.broadcast %cst_62 : f32 to vector<8x128xf32>
    %104 = arith.mulf %103, %102 : vector<8x128xf32>
    %105 = math.tanh %104 : vector<8x128xf32>
    %cst_63 = arith.constant 5.000000e-01 : f32
    %106 = vector.broadcast %cst_63 : f32 to vector<8x128xf32>
    %107 = arith.mulf %106, %105 : vector<8x128xf32>
    %cst_64 = arith.constant 5.000000e-01 : f32
    %108 = vector.broadcast %cst_64 : f32 to vector<8x128xf32>
    %109 = arith.addf %107, %108 : vector<8x128xf32>
    %110 = math.tanh %102 : vector<8x128xf32>
    %111 = vector.extract_strided_slice %109 {offsets = [0, 0], sizes = [8, 32], strides = [1, 1]} : vector<8x128xf32> to vector<8x32xf32>
    %112 = vector.extract_strided_slice %109 {offsets = [0, 32], sizes = [8, 32], strides = [1, 1]} : vector<8x128xf32> to vector<8x32xf32>
    %113 = vector.extract_strided_slice %110 {offsets = [0, 64], sizes = [8, 32], strides = [1, 1]} : vector<8x128xf32> to vector<8x32xf32>
    %114 = vector.extract_strided_slice %109 {offsets = [0, 96], sizes = [8, 32], strides = [1, 1]} : vector<8x128xf32> to vector<8x32xf32>
    %115 = arith.mulf %112, %95 : vector<8x32xf32>
    %116 = arith.mulf %111, %113 : vector<8x32xf32>
    %117 = arith.addf %115, %116 : vector<8x32xf32>
    %118 = math.tanh %117 : vector<8x32xf32>
    %119 = arith.mulf %114, %118 : vector<8x32xf32>
    %c8_65 = arith.constant 8 : index
    %c0_66 = arith.constant 0 : index
    %120 = vector.load %arg10[%c8_65, %c0_66] : memref<64x32xf32, #tpu.memory_space<vmem>>, vector<8x32xf32>
    tpu.vector_store %arg10[%c8_65, %c0_66], %119 {strides = array<i32>} : memref<64x32xf32, #tpu.memory_space<vmem>>, vector<8x32xf32>,
    %c16_67 = arith.constant 16 : index
    %c0_68 = arith.constant 0 : index
    %121 = vector.load %arg9[%c16_67, %c0_68] : memref<64x128xf32, #tpu.memory_space<vmem>>, vector<8x128xf32>
    %122 = arith.truncf %119 : vector<8x32xf32> to vector<8x32xbf16>
    %cst_69 = arith.constant dense<0.000000e+00> : vector<8x128xf32>
    %123 = tpu.matmul %122, %74, %cst_69 {dimension_numbers = #tpu.dot_dimension_numbers<[1], [0], [0], [1], [0, 0, 1, 1], [], []>} : vector<8x32xbf16>, vector<32x128xbf16>, vector<8x128xf32> -> vector<8x128xf32>
    %124 = arith.addf %121, %123 : vector<8x128xf32>
    %cst_70 = arith.constant 5.000000e-01 : f32
    %125 = vector.broadcast %cst_70 : f32 to vector<8x128xf32>
    %126 = arith.mulf %125, %124 : vector<8x128xf32>
    %127 = math.tanh %126 : vector<8x128xf32>
    %cst_71 = arith.constant 5.000000e-01 : f32
    %128 = vector.broadcast %cst_71 : f32 to vector<8x128xf32>
    %129 = arith.mulf %128, %127 : vector<8x128xf32>
    %cst_72 = arith.constant 5.000000e-01 : f32
    %130 = vector.broadcast %cst_72 : f32 to vector<8x128xf32>
    %131 = arith.addf %129, %130 : vector<8x128xf32>
    %132 = math.tanh %124 : vector<8x128xf32>
    %133 = vector.extract_strided_slice %131 {offsets = [0, 0], sizes = [8, 32], strides = [1, 1]} : vector<8x128xf32> to vector<8x32xf32>
    %134 = vector.extract_strided_slice %131 {offsets = [0, 32], sizes = [8, 32], strides = [1, 1]} : vector<8x128xf32> to vector<8x32xf32>
    %135 = vector.extract_strided_slice %132 {offsets = [0, 64], sizes = [8, 32], strides = [1, 1]} : vector<8x128xf32> to vector<8x32xf32>
    %136 = vector.extract_strided_slice %131 {offsets = [0, 96], sizes = [8, 32], strides = [1, 1]} : vector<8x128xf32> to vector<8x32xf32>
    %137 = arith.mulf %134, %117 : vector<8x32xf32>
    %138 = arith.mulf %133, %135 : vector<8x32xf32>
    %139 = arith.addf %137, %138 : vector<8x32xf32>
    %140 = math.tanh %139 : vector<8x32xf32>
    %141 = arith.mulf %136, %140 : vector<8x32xf32>
    %c16_73 = arith.constant 16 : index
    %c0_74 = arith.constant 0 : index
    %142 = vector.load %arg10[%c16_73, %c0_74] : memref<64x32xf32, #tpu.memory_space<vmem>>, vector<8x32xf32>
    tpu.vector_store %arg10[%c16_73, %c0_74], %141 {strides = array<i32>} : memref<64x32xf32, #tpu.memory_space<vmem>>, vector<8x32xf32>,
    %c24_75 = arith.constant 24 : index
    %c0_76 = arith.constant 0 : index
    %143 = vector.load %arg9[%c24_75, %c0_76] : memref<64x128xf32, #tpu.memory_space<vmem>>, vector<8x128xf32>
    %144 = arith.truncf %141 : vector<8x32xf32> to vector<8x32xbf16>
    %cst_77 = arith.constant dense<0.000000e+00> : vector<8x128xf32>
    %145 = tpu.matmul %144, %74, %cst_77 {dimension_numbers = #tpu.dot_dimension_numbers<[1], [0], [0], [1], [0, 0, 1, 1], [], []>} : vector<8x32xbf16>, vector<32x128xbf16>, vector<8x128xf32> -> vector<8x128xf32>
    %146 = arith.addf %143, %145 : vector<8x128xf32>
    %cst_78 = arith.constant 5.000000e-01 : f32
    %147 = vector.broadcast %cst_78 : f32 to vector<8x128xf32>
    %148 = arith.mulf %147, %146 : vector<8x128xf32>
    %149 = math.tanh %148 : vector<8x128xf32>
    %cst_79 = arith.constant 5.000000e-01 : f32
    %150 = vector.broadcast %cst_79 : f32 to vector<8x128xf32>
    %151 = arith.mulf %150, %149 : vector<8x128xf32>
    %cst_80 = arith.constant 5.000000e-01 : f32
    %152 = vector.broadcast %cst_80 : f32 to vector<8x128xf32>
    %153 = arith.addf %151, %152 : vector<8x128xf32>
    %154 = math.tanh %146 : vector<8x128xf32>
    %155 = vector.extract_strided_slice %153 {offsets = [0, 0], sizes = [8, 32], strides = [1, 1]} : vector<8x128xf32> to vector<8x32xf32>
    %156 = vector.extract_strided_slice %153 {offsets = [0, 32], sizes = [8, 32], strides = [1, 1]} : vector<8x128xf32> to vector<8x32xf32>
    %157 = vector.extract_strided_slice %154 {offsets = [0, 64], sizes = [8, 32], strides = [1, 1]} : vector<8x128xf32> to vector<8x32xf32>
    %158 = vector.extract_strided_slice %153 {offsets = [0, 96], sizes = [8, 32], strides = [1, 1]} : vector<8x128xf32> to vector<8x32xf32>
    %159 = arith.mulf %156, %139 : vector<8x32xf32>
    %160 = arith.mulf %155, %157 : vector<8x32xf32>
    %161 = arith.addf %159, %160 : vector<8x32xf32>
    %162 = math.tanh %161 : vector<8x32xf32>
    %163 = arith.mulf %158, %162 : vector<8x32xf32>
    %c24_81 = arith.constant 24 : index
    %c0_82 = arith.constant 0 : index
    %164 = vector.load %arg10[%c24_81, %c0_82] : memref<64x32xf32, #tpu.memory_space<vmem>>, vector<8x32xf32>
    tpu.vector_store %arg10[%c24_81, %c0_82], %163 {strides = array<i32>} : memref<64x32xf32, #tpu.memory_space<vmem>>, vector<8x32xf32>,
    %c32_83 = arith.constant 32 : index
    %c0_84 = arith.constant 0 : index
    %165 = vector.load %arg9[%c32_83, %c0_84] : memref<64x128xf32, #tpu.memory_space<vmem>>, vector<8x128xf32>
    %166 = arith.truncf %163 : vector<8x32xf32> to vector<8x32xbf16>
    %cst_85 = arith.constant dense<0.000000e+00> : vector<8x128xf32>
    %167 = tpu.matmul %166, %74, %cst_85 {dimension_numbers = #tpu.dot_dimension_numbers<[1], [0], [0], [1], [0, 0, 1, 1], [], []>} : vector<8x32xbf16>, vector<32x128xbf16>, vector<8x128xf32> -> vector<8x128xf32>
    %168 = arith.addf %165, %167 : vector<8x128xf32>
    %cst_86 = arith.constant 5.000000e-01 : f32
    %169 = vector.broadcast %cst_86 : f32 to vector<8x128xf32>
    %170 = arith.mulf %169, %168 : vector<8x128xf32>
    %171 = math.tanh %170 : vector<8x128xf32>
    %cst_87 = arith.constant 5.000000e-01 : f32
    %172 = vector.broadcast %cst_87 : f32 to vector<8x128xf32>
    %173 = arith.mulf %172, %171 : vector<8x128xf32>
    %cst_88 = arith.constant 5.000000e-01 : f32
    %174 = vector.broadcast %cst_88 : f32 to vector<8x128xf32>
    %175 = arith.addf %173, %174 : vector<8x128xf32>
    %176 = math.tanh %168 : vector<8x128xf32>
    %177 = vector.extract_strided_slice %175 {offsets = [0, 0], sizes = [8, 32], strides = [1, 1]} : vector<8x128xf32> to vector<8x32xf32>
    %178 = vector.extract_strided_slice %175 {offsets = [0, 32], sizes = [8, 32], strides = [1, 1]} : vector<8x128xf32> to vector<8x32xf32>
    %179 = vector.extract_strided_slice %176 {offsets = [0, 64], sizes = [8, 32], strides = [1, 1]} : vector<8x128xf32> to vector<8x32xf32>
    %180 = vector.extract_strided_slice %175 {offsets = [0, 96], sizes = [8, 32], strides = [1, 1]} : vector<8x128xf32> to vector<8x32xf32>
    %181 = arith.mulf %178, %161 : vector<8x32xf32>
    %182 = arith.mulf %177, %179 : vector<8x32xf32>
    %183 = arith.addf %181, %182 : vector<8x32xf32>
    %184 = math.tanh %183 : vector<8x32xf32>
    %185 = arith.mulf %180, %184 : vector<8x32xf32>
    %c32_89 = arith.constant 32 : index
    %c0_90 = arith.constant 0 : index
    %186 = vector.load %arg10[%c32_89, %c0_90] : memref<64x32xf32, #tpu.memory_space<vmem>>, vector<8x32xf32>
    tpu.vector_store %arg10[%c32_89, %c0_90], %185 {strides = array<i32>} : memref<64x32xf32, #tpu.memory_space<vmem>>, vector<8x32xf32>,
    %c40_91 = arith.constant 40 : index
    %c0_92 = arith.constant 0 : index
    %187 = vector.load %arg9[%c40_91, %c0_92] : memref<64x128xf32, #tpu.memory_space<vmem>>, vector<8x128xf32>
    %188 = arith.truncf %185 : vector<8x32xf32> to vector<8x32xbf16>
    %cst_93 = arith.constant dense<0.000000e+00> : vector<8x128xf32>
    %189 = tpu.matmul %188, %74, %cst_93 {dimension_numbers = #tpu.dot_dimension_numbers<[1], [0], [0], [1], [0, 0, 1, 1], [], []>} : vector<8x32xbf16>, vector<32x128xbf16>, vector<8x128xf32> -> vector<8x128xf32>
    %190 = arith.addf %187, %189 : vector<8x128xf32>
    %cst_94 = arith.constant 5.000000e-01 : f32
    %191 = vector.broadcast %cst_94 : f32 to vector<8x128xf32>
    %192 = arith.mulf %191, %190 : vector<8x128xf32>
    %193 = math.tanh %192 : vector<8x128xf32>
    %cst_95 = arith.constant 5.000000e-01 : f32
    %194 = vector.broadcast %cst_95 : f32 to vector<8x128xf32>
    %195 = arith.mulf %194, %193 : vector<8x128xf32>
    %cst_96 = arith.constant 5.000000e-01 : f32
    %196 = vector.broadcast %cst_96 : f32 to vector<8x128xf32>
    %197 = arith.addf %195, %196 : vector<8x128xf32>
    %198 = math.tanh %190 : vector<8x128xf32>
    %199 = vector.extract_strided_slice %197 {offsets = [0, 0], sizes = [8, 32], strides = [1, 1]} : vector<8x128xf32> to vector<8x32xf32>
    %200 = vector.extract_strided_slice %197 {offsets = [0, 32], sizes = [8, 32], strides = [1, 1]} : vector<8x128xf32> to vector<8x32xf32>
    %201 = vector.extract_strided_slice %198 {offsets = [0, 64], sizes = [8, 32], strides = [1, 1]} : vector<8x128xf32> to vector<8x32xf32>
    %202 = vector.extract_strided_slice %197 {offsets = [0, 96], sizes = [8, 32], strides = [1, 1]} : vector<8x128xf32> to vector<8x32xf32>
    %203 = arith.mulf %200, %183 : vector<8x32xf32>
    %204 = arith.mulf %199, %201 : vector<8x32xf32>
    %205 = arith.addf %203, %204 : vector<8x32xf32>
    %206 = math.tanh %205 : vector<8x32xf32>
    %207 = arith.mulf %202, %206 : vector<8x32xf32>
    %c40_97 = arith.constant 40 : index
    %c0_98 = arith.constant 0 : index
    %208 = vector.load %arg10[%c40_97, %c0_98] : memref<64x32xf32, #tpu.memory_space<vmem>>, vector<8x32xf32>
    tpu.vector_store %arg10[%c40_97, %c0_98], %207 {strides = array<i32>} : memref<64x32xf32, #tpu.memory_space<vmem>>, vector<8x32xf32>,
    %c48_99 = arith.constant 48 : index
    %c0_100 = arith.constant 0 : index
    %209 = vector.load %arg9[%c48_99, %c0_100] : memref<64x128xf32, #tpu.memory_space<vmem>>, vector<8x128xf32>
    %210 = arith.truncf %207 : vector<8x32xf32> to vector<8x32xbf16>
    %cst_101 = arith.constant dense<0.000000e+00> : vector<8x128xf32>
    %211 = tpu.matmul %210, %74, %cst_101 {dimension_numbers = #tpu.dot_dimension_numbers<[1], [0], [0], [1], [0, 0, 1, 1], [], []>} : vector<8x32xbf16>, vector<32x128xbf16>, vector<8x128xf32> -> vector<8x128xf32>
    %212 = arith.addf %209, %211 : vector<8x128xf32>
    %cst_102 = arith.constant 5.000000e-01 : f32
    %213 = vector.broadcast %cst_102 : f32 to vector<8x128xf32>
    %214 = arith.mulf %213, %212 : vector<8x128xf32>
    %215 = math.tanh %214 : vector<8x128xf32>
    %cst_103 = arith.constant 5.000000e-01 : f32
    %216 = vector.broadcast %cst_103 : f32 to vector<8x128xf32>
    %217 = arith.mulf %216, %215 : vector<8x128xf32>
    %cst_104 = arith.constant 5.000000e-01 : f32
    %218 = vector.broadcast %cst_104 : f32 to vector<8x128xf32>
    %219 = arith.addf %217, %218 : vector<8x128xf32>
    %220 = math.tanh %212 : vector<8x128xf32>
    %221 = vector.extract_strided_slice %219 {offsets = [0, 0], sizes = [8, 32], strides = [1, 1]} : vector<8x128xf32> to vector<8x32xf32>
    %222 = vector.extract_strided_slice %219 {offsets = [0, 32], sizes = [8, 32], strides = [1, 1]} : vector<8x128xf32> to vector<8x32xf32>
    %223 = vector.extract_strided_slice %220 {offsets = [0, 64], sizes = [8, 32], strides = [1, 1]} : vector<8x128xf32> to vector<8x32xf32>
    %224 = vector.extract_strided_slice %219 {offsets = [0, 96], sizes = [8, 32], strides = [1, 1]} : vector<8x128xf32> to vector<8x32xf32>
    %225 = arith.mulf %222, %205 : vector<8x32xf32>
    %226 = arith.mulf %221, %223 : vector<8x32xf32>
    %227 = arith.addf %225, %226 : vector<8x32xf32>
    %228 = math.tanh %227 : vector<8x32xf32>
    %229 = arith.mulf %224, %228 : vector<8x32xf32>
    %c48_105 = arith.constant 48 : index
    %c0_106 = arith.constant 0 : index
    %230 = vector.load %arg10[%c48_105, %c0_106] : memref<64x32xf32, #tpu.memory_space<vmem>>, vector<8x32xf32>
    tpu.vector_store %arg10[%c48_105, %c0_106], %229 {strides = array<i32>} : memref<64x32xf32, #tpu.memory_space<vmem>>, vector<8x32xf32>,
    %c56_107 = arith.constant 56 : index
    %c0_108 = arith.constant 0 : index
    %231 = vector.load %arg9[%c56_107, %c0_108] : memref<64x128xf32, #tpu.memory_space<vmem>>, vector<8x128xf32>
    %232 = arith.truncf %229 : vector<8x32xf32> to vector<8x32xbf16>
    %cst_109 = arith.constant dense<0.000000e+00> : vector<8x128xf32>
    %233 = tpu.matmul %232, %74, %cst_109 {dimension_numbers = #tpu.dot_dimension_numbers<[1], [0], [0], [1], [0, 0, 1, 1], [], []>} : vector<8x32xbf16>, vector<32x128xbf16>, vector<8x128xf32> -> vector<8x128xf32>
    %234 = arith.addf %231, %233 : vector<8x128xf32>
    %cst_110 = arith.constant 5.000000e-01 : f32
    %235 = vector.broadcast %cst_110 : f32 to vector<8x128xf32>
    %236 = arith.mulf %235, %234 : vector<8x128xf32>
    %237 = math.tanh %236 : vector<8x128xf32>
    %cst_111 = arith.constant 5.000000e-01 : f32
    %238 = vector.broadcast %cst_111 : f32 to vector<8x128xf32>
    %239 = arith.mulf %238, %237 : vector<8x128xf32>
    %cst_112 = arith.constant 5.000000e-01 : f32
    %240 = vector.broadcast %cst_112 : f32 to vector<8x128xf32>
    %241 = arith.addf %239, %240 : vector<8x128xf32>
    %242 = math.tanh %234 : vector<8x128xf32>
    %243 = vector.extract_strided_slice %241 {offsets = [0, 0], sizes = [8, 32], strides = [1, 1]} : vector<8x128xf32> to vector<8x32xf32>
    %244 = vector.extract_strided_slice %241 {offsets = [0, 32], sizes = [8, 32], strides = [1, 1]} : vector<8x128xf32> to vector<8x32xf32>
    %245 = vector.extract_strided_slice %242 {offsets = [0, 64], sizes = [8, 32], strides = [1, 1]} : vector<8x128xf32> to vector<8x32xf32>
    %246 = vector.extract_strided_slice %241 {offsets = [0, 96], sizes = [8, 32], strides = [1, 1]} : vector<8x128xf32> to vector<8x32xf32>
    %247 = arith.mulf %244, %227 : vector<8x32xf32>
    %248 = arith.mulf %243, %245 : vector<8x32xf32>
    %249 = arith.addf %247, %248 : vector<8x32xf32>
    %250 = math.tanh %249 : vector<8x32xf32>
    %251 = arith.mulf %246, %250 : vector<8x32xf32>
    %c56_113 = arith.constant 56 : index
    %c0_114 = arith.constant 0 : index
    %252 = vector.load %arg10[%c56_113, %c0_114] : memref<64x32xf32, #tpu.memory_space<vmem>>, vector<8x32xf32>
    tpu.vector_store %arg10[%c56_113, %c0_114], %251 {strides = array<i32>} : memref<64x32xf32, #tpu.memory_space<vmem>>, vector<8x32xf32>,
    %c0_115 = arith.constant 0 : index
    %c0_116 = arith.constant 0 : index
    %253 = vector.load %arg10[%c0_115, %c0_116] : memref<64x32xf32, #tpu.memory_space<vmem>>, vector<64x32xf32>
    %254 = arith.truncf %253 : vector<64x32xf32> to vector<64x32xbf16>
    %c0_117 = arith.constant 0 : index
    %c0_118 = arith.constant 0 : index
    %255 = vector.load %arg5[%c0_117, %c0_118] : memref<32x128xbf16, #tpu.memory_space<vmem>>, vector<32x128xbf16>
    %cst_119 = arith.constant dense<0.000000e+00> : vector<64x128xf32>
    %256 = tpu.matmul %254, %255, %cst_119 {dimension_numbers = #tpu.dot_dimension_numbers<[1], [0], [0], [1], [0, 0, 1, 1], [], []>} : vector<64x32xbf16>, vector<32x128xbf16>, vector<64x128xf32> -> vector<64x128xf32>
    %c0_120 = arith.constant 0 : index
    %c0_121 = arith.constant 0 : index
    %257 = vector.load %arg6[%c0_120, %c0_121] : memref<1x128xf32, #tpu.memory_space<vmem>>, vector<1x128xf32>
    %258 = vector.broadcast %257 : vector<1x128xf32> to vector<64x128xf32>
    %259 = arith.addf %256, %258 : vector<64x128xf32>
    %c0_122 = arith.constant 0 : index
    %c0_123 = arith.constant 0 : index
    %260 = vector.load %arg7[%c0_122, %c0_123] : memref<64x128xf32, #tpu.memory_space<vmem>>, vector<64x128xf32>
    tpu.vector_store %arg7[%c0_122, %c0_123], %259 {strides = array<i32>} : memref<64x128xf32, #tpu.memory_space<vmem>>, vector<64x128xf32>,
    return
  }
}

</mosaic_0001>

<llo_original>
// kernel: lstm_forward.1
$region0: #{lstm_forward.1}
  #allocation0 [shape = 'u32[]', space=smem, size = 0x4, offset = 0x4, fixed_abs, tag = 'smem constant byte address 0x4 - core index']
  #allocation1 [shape = 'u32[144,128]{1,0:T(1,128)}', space=vmem, size = 0x12000, scoped, tag = 'internal scratch']
  #allocation2 [shape = 'f32[64,384]{1,0:T(8,128)}', space=vmem, size = 0x18000, scoped, tag = 'scratch operand']
  #allocation3 [shape = 'f32[64,128]{1,0:T(8,128)}', space=vmem, size = 0x8000, scoped, tag = 'scratch operand']
  #allocation4 [shape = 'f32[64,32]{1,0:T(8,128)}', space=vmem, size = 0x8000, scoped, tag = 'scratch operand']
  %s0 = inlined_call_operand.vmem [shape: s32[16], index: 0, kind: input, shape index: {}]
  %s1 = inlined_call_operand.hbm [shape: f32[50,384], index: 1, kind: input, shape index: {}]
  %s2 = inlined_call_operand.hbm [shape: bf16[384,128], index: 2, kind: input, shape index: {}]
  %s3 = inlined_call_operand.hbm [shape: bf16[32,128], index: 3, kind: input, shape index: {}]
  %s4 = inlined_call_operand.vmem [shape: f32[1,128], index: 4, kind: input, shape index: {}]
  %s5 = inlined_call_operand.hbm [shape: bf16[32,128], index: 5, kind: input, shape index: {}]
  %s6 = inlined_call_operand.vmem [shape: f32[1,128], index: 6, kind: input, shape index: {}]
  %s7 = inlined_call_operand.vmem [shape: f32[64,128], index: 7, kind: output, shape index: {}]
  %s8 = sld [smem:[#allocation0]]
  $region58: #{lstm_forward.1} parent=0
    _
  %s10 = ssub.s32 1, %s8
  %s11 = scalar_select 0, %s10, %s8
  $region1: #{lstm_forward.1} parent=0
    #allocation5 [shape = 'u8[512]{0}', space=smem, size = 0x200, scoped, tag = 'input window, operand 0, single buffered']
    #allocation6 [shape = 's32[1]{0}', space=sflag, size = 0x4, scoped, tag = 'scoped memory for lstm_forward.1']
    #allocation7 [shape = 's32[1]{0}', space=sflag, size = 0x4, scoped, tag = 'scoped memory for lstm_forward.1']
    #allocation8 [shape = 'u8[86016]{0}', space=vmem, size = 0x15000, scoped, tag = 'input window, operand 1, single buffered']
    #allocation9 [shape = 'u8[98304]{0}', space=vmem, size = 0x18000, scoped, tag = 'input window, operand 2, single buffered']
    #allocation10 [shape = 's32[1]{0}', space=sflag, size = 0x4, scoped, tag = 'scoped memory for lstm_forward.1']
    #allocation11 [shape = 'u8[8192]{0}', space=vmem, size = 0x2000, scoped, tag = 'input window, operand 3, single buffered']
    #allocation12 [shape = 'u8[8192]{0}', space=vmem, size = 0x2000, scoped, tag = 'input window, operand 5, single buffered']
    #allocation13 [shape = 's32[1]{0}', space=sflag, size = 0x4, scoped, tag = 'scoped memory for lstm_forward.1']
    %12 = vsyncpa [#allocation7], 0
    %13 = vsyncpa [#allocation6], 0
    %14 = vsyncpa [#allocation10], 0
    %15 = vsyncpa [#allocation13], 0
    // Predicated region
    $region2: #{lstm_forward.1} parent=1 // pred_check
      _
    $region3: #{lstm_forward.1} parent=1 // pred_check_branch
      %17 = sbr.rel (0) target = $region5
    $region4: #{lstm_forward.1} parent=1 // pred_region
      %s19 = ssub.s32 16, 16
      %20 = vsyncadd [#allocation7], %s19
      %s22 = sshll.u32 %s0, 4
      %s23 = int_to_ptr.vmem [resolvable:$true] %s22
      %25 = dma.vmem_to_smem %s23, 16, [#allocation5], [#allocation7]
    $region5: #{lstm_forward.1} parent=1 // pred_fallthru
      _
    // Predicated region
    $region6: #{lstm_forward.1} parent=1 // pred_check
      _
    $region7: #{lstm_forward.1} parent=1 // pred_check_branch
      %27 = sbr.rel (0) target = $region9
    $region8: #{lstm_forward.1} parent=1 // pred_region
      %s29 = ssub.s32 2688, 2688
      %30 = vsyncadd [#allocation6], %s29
      %s31 = sshll.u32 [#allocation8], 4
      %s32 = int_to_ptr.vmem [resolvable:$true] %s31
      %37 = dma.hbm_to_vmem [thread:$0]  %s1, 2688, %s32, [#allocation6], 384, 384, 24
    $region9: #{lstm_forward.1} parent=1 // pred_fallthru
      _
    // Predicated region
    $region10: #{lstm_forward.1} parent=1 // pred_check
      _
    $region11: #{lstm_forward.1} parent=1 // pred_check_branch
      %39 = sbr.rel (0) target = $region13
    $region12: #{lstm_forward.1} parent=1 // pred_region
      %s41 = ssub.s32 3072, 3072
      %42 = vsyncadd [#allocation10], %s41
      %s43 = sshll.u32 [#allocation9], 4
      %s44 = int_to_ptr.vmem [resolvable:$true] %s43
      %49 = dma.hbm_to_vmem [thread:$0]  %s2, 3072, %s44, [#allocation10], 64, 64, 4
    $region13: #{lstm_forward.1} parent=1 // pred_fallthru
      _
    // Predicated region
    $region14: #{lstm_forward.1} parent=1 // pred_check
      _
    $region15: #{lstm_forward.1} parent=1 // pred_check_branch
      %51 = sbr.rel (0) target = $region17
    $region16: #{lstm_forward.1} parent=1 // pred_region
      %s53 = ssub.s32 256, 256
      %54 = vsyncadd [#allocation10], %s53
      %s55 = sshll.u32 [#allocation11], 4
      %s56 = int_to_ptr.vmem [resolvable:$true] %s55
      %61 = dma.hbm_to_vmem [thread:$0]  %s3, 256, %s56, [#allocation10], 64, 64, 4
    $region17: #{lstm_forward.1} parent=1 // pred_fallthru
      _
    // Predicated region
    $region18: #{lstm_forward.1} parent=1 // pred_check
      _
    $region19: #{lstm_forward.1} parent=1 // pred_check_branch
      %63 = sbr.rel (0) target = $region21
    $region20: #{lstm_forward.1} parent=1 // pred_region
      _
    $region21: #{lstm_forward.1} parent=1 // pred_fallthru
      _
    // Predicated region
    $region22: #{lstm_forward.1} parent=1 // pred_check
      _
    $region23: #{lstm_forward.1} parent=1 // pred_check_branch
      %65 = sbr.rel (0) target = $region25
    $region24: #{lstm_forward.1} parent=1 // pred_region
      %s67 = ssub.s32 256, 256
      %68 = vsyncadd [#allocation13], %s67
      %s69 = sshll.u32 [#allocation12], 4
      %s70 = int_to_ptr.vmem [resolvable:$true] %s69
      %75 = dma.hbm_to_vmem [thread:$0]  %s5, 256, %s70, [#allocation13], 64, 64, 4
    $region25: #{lstm_forward.1} parent=1 // pred_fallthru
      _
    // Predicated region
    $region26: #{lstm_forward.1} parent=1 // pred_check
      _
    $region27: #{lstm_forward.1} parent=1 // pred_check_branch
      %77 = sbr.rel (0) target = $region29
    $region28: #{lstm_forward.1} parent=1 // pred_region
      _
    $region29: #{lstm_forward.1} parent=1 // pred_fallthru
      _
    // Predicated region
    $region30: #{lstm_forward.1} parent=1 // pred_check
      _
    $region31: #{lstm_forward.1} parent=1 // pred_check_branch
      %79 = sbr.rel (0) target = $region33
    $region32: #{lstm_forward.1} parent=1 // pred_region
      %80 = dma.done [#allocation7], 16
    $region33: #{lstm_forward.1} parent=1 // pred_fallthru
      _
    // Predicated region
    $region34: #{lstm_forward.1} parent=1 // pred_check
      _
    $region35: #{lstm_forward.1} parent=1 // pred_check_branch
      %82 = sbr.rel (0) target = $region37
    $region36: #{lstm_forward.1} parent=1 // pred_region
      %83 = dma.done [#allocation6], 2688
    $region37: #{lstm_forward.1} parent=1 // pred_fallthru
      _
    // Predicated region
    $region38: #{lstm_forward.1} parent=1 // pred_check
      _
    $region39: #{lstm_forward.1} parent=1 // pred_check_branch
      %85 = sbr.rel (0) target = $region41
    $region40: #{lstm_forward.1} parent=1 // pred_region
      %86 = dma.done [#allocation10], 3072
    $region41: #{lstm_forward.1} parent=1 // pred_fallthru
      _
    // Predicated region
    $region42: #{lstm_forward.1} parent=1 // pred_check
      _
    $region43: #{lstm_forward.1} parent=1 // pred_check_branch
      %88 = sbr.rel (0) target = $region45
    $region44: #{lstm_forward.1} parent=1 // pred_region
      %89 = dma.done [#allocation10], 256
    $region45: #{lstm_forward.1} parent=1 // pred_fallthru
      _
    // Predicated region
    $region46: #{lstm_forward.1} parent=1 // pred_check
      _
    $region47: #{lstm_forward.1} parent=1 // pred_check_branch
      %91 = sbr.rel (0) target = $region49
    $region48: #{lstm_forward.1} parent=1 // pred_region
      %92 = dma.done [#allocation13], 256
    $region49: #{lstm_forward.1} parent=1 // pred_fallthru
      _
    %93 = sfence
    %95 = vst [vmem:[#allocation2] sm:$0xff] 0.0
    %96 = vst [vmem:[#allocation2 + $0x8] sm:$0xff] 0.0
    %97 = vst [vmem:[#allocation2 + $0x10] sm:$0xff] 0.0
    %98 = vst [vmem:[#allocation2 + $0x18] sm:$0xff] 0.0
    %99 = vst [vmem:[#allocation2 + $0x20] sm:$0xff] 0.0
    %100 = vst [vmem:[#allocation2 + $0x28] sm:$0xff] 0.0
    %101 = vst [vmem:[#allocation2 + $0x30] sm:$0xff] 0.0
    %102 = vst [vmem:[#allocation2 + $0x38] sm:$0xff] 0.0
    %103 = vst [vmem:[#allocation2 + $0x40] sm:$0xff] 0.0
    %104 = vst [vmem:[#allocation2 + $0x48] sm:$0xff] 0.0
    %105 = vst [vmem:[#allocation2 + $0x50] sm:$0xff] 0.0
    %106 = vst [vmem:[#allocation2 + $0x58] sm:$0xff] 0.0
    %107 = vst [vmem:[#allocation2 + $0x60] sm:$0xff] 0.0
    %108 = vst [vmem:[#allocation2 + $0x68] sm:$0xff] 0.0
    %109 = vst [vmem:[#allocation2 + $0x70] sm:$0xff] 0.0
    %110 = vst [vmem:[#allocation2 + $0x78] sm:$0xff] 0.0
    %111 = vst [vmem:[#allocation2 + $0x80] sm:$0xff] 0.0
    %112 = vst [vmem:[#allocation2 + $0x88] sm:$0xff] 0.0
    %113 = vst [vmem:[#allocation2 + $0x90] sm:$0xff] 0.0
    %114 = vst [vmem:[#allocation2 + $0x98] sm:$0xff] 0.0
    %115 = vst [vmem:[#allocation2 + $0xa0] sm:$0xff] 0.0
    %116 = vst [vmem:[#allocation2 + $0xa8] sm:$0xff] 0.0
    %117 = vst [vmem:[#allocation2 + $0xb0] sm:$0xff] 0.0
    %118 = vst [vmem:[#allocation2 + $0xb8] sm:$0xff] 0.0
    %s119 = sld [smem:[#allocation5]]
    %s120 = sshra.s32 %s119, 3
    %s121 = sand.u32 %s119, 7
    %s122 = sshra.s32 %s119, 3
    %s123 = sand.u32 %s119, 7
    %s124 = smul.u32 %s120, 3
    %s125 = smul.u32 %s124, 8
    %s126 = sadd.s32 %s125, %s123
    %s127 = scalar_lea.vmem [#allocation8], %s126
    %v128 = vld [vmem:[%s127] ss:$8 sm:$0x7]
    %v129 = vlaneseq
    %vm130 = vcmp.ge.s32.totalorder %v129, 0
    %vm131 = vcmp.lt.s32.totalorder %v129, 384
    %vm132 = vmand %vm130, %vm131
    %133 = vst.msk [vmem:[#allocation2] ss:$8 sm:$0x7] %vm132, %v128
    %134 = vst.msk [vmem:[#allocation2] ss:$8 sm:$0x0] %vm132, %v128
    %s135 = sld [smem:[#allocation5 + $0x8]]
    %s136 = sshra.s32 %s135, 3
    %s137 = sand.u32 %s135, 7
    %s138 = sshra.s32 %s135, 3
    %s139 = sand.u32 %s135, 7
    %s140 = smul.u32 %s136, 3
    %s141 = smul.u32 %s140, 8
    %s142 = sadd.s32 %s141, %s139
    %s143 = scalar_lea.vmem [#allocation8], %s142
    %v144 = vld [vmem:[%s143] ss:$8 sm:$0x7]
    %s145 = scalar_lea.vmem [#allocation2], 1
    %146 = vst.msk [vmem:[%s145] ss:$8 sm:$0x7] %vm132, %v144
    %147 = vst.msk [vmem:[%s145] ss:$8 sm:$0x0] %vm132, %v144
    %s148 = sld [smem:[#allocation5 + $0x1]]
    %s149 = sshra.s32 %s148, 3
    %s150 = sand.u32 %s148, 7
    %s151 = sshra.s32 %s148, 3
    %s152 = sand.u32 %s148, 7
    %s153 = smul.u32 %s149, 3
    %s154 = smul.u32 %s153, 8
    %s155 = sadd.s32 %s154, %s152
    %s156 = scalar_lea.vmem [#allocation8], %s155
    %v157 = vld [vmem:[%s156] ss:$8 sm:$0x7]
    %s158 = scalar_lea.vmem [#allocation2], 24
    %159 = vst.msk [vmem:[%s158] ss:$8 sm:$0x7] %vm132, %v157
    %160 = vst.msk [vmem:[%s158] ss:$8 sm:$0x0] %vm132, %v157
    %s161 = sld [smem:[#allocation5 + $0x9]]
    %s162 = sshra.s32 %s161, 3
    %s163 = sand.u32 %s161, 7
    %s164 = sshra.s32 %s161, 3
    %s165 = sand.u32 %s161, 7
    %s166 = smul.u32 %s162, 3
    %s167 = smul.u32 %s166, 8
    %s168 = sadd.s32 %s167, %s165
    %s169 = scalar_lea.vmem [#allocation8], %s168
    %v170 = vld [vmem:[%s169] ss:$8 sm:$0x7]
    %s171 = scalar_lea.vmem [#allocation2], 25
    %172 = vst.msk [vmem:[%s171] ss:$8 sm:$0x7] %vm132, %v170
    %173 = vst.msk [vmem:[%s171] ss:$8 sm:$0x0] %vm132, %v170
    %s174 = sld [smem:[#allocation5 + $0x2]]
    %s175 = sshra.s32 %s174, 3
    %s176 = sand.u32 %s174, 7
    %s177 = sshra.s32 %s174, 3
    %s178 = sand.u32 %s174, 7
    %s179 = smul.u32 %s175, 3
    %s180 = smul.u32 %s179, 8
    %s181 = sadd.s32 %s180, %s178
    %s182 = scalar_lea.vmem [#allocation8], %s181
    %v183 = vld [vmem:[%s182] ss:$8 sm:$0x7]
    %s184 = scalar_lea.vmem [#allocation2], 48
    %185 = vst.msk [vmem:[%s184] ss:$8 sm:$0x7] %vm132, %v183
    %186 = vst.msk [vmem:[%s184] ss:$8 sm:$0x0] %vm132, %v183
    %s187 = sld [smem:[#allocation5 + $0xa]]
    %s188 = sshra.s32 %s187, 3
    %s189 = sand.u32 %s187, 7
    %s190 = sshra.s32 %s187, 3
    %s191 = sand.u32 %s187, 7
    %s192 = smul.u32 %s188, 3
    %s193 = smul.u32 %s192, 8
    %s194 = sadd.s32 %s193, %s191
    %s195 = scalar_lea.vmem [#allocation8], %s194
    %v196 = vld [vmem:[%s195] ss:$8 sm:$0x7]
    %s197 = scalar_lea.vmem [#allocation2], 49
    %198 = vst.msk [vmem:[%s197] ss:$8 sm:$0x7] %vm132, %v196
    %199 = vst.msk [vmem:[%s197] ss:$8 sm:$0x0] %vm132, %v196
    %s200 = sld [smem:[#allocation5 + $0x3]]
    %s201 = sshra.s32 %s200, 3
    %s202 = sand.u32 %s200, 7
    %s203 = sshra.s32 %s200, 3
    %s204 = sand.u32 %s200, 7
    %s205 = smul.u32 %s201, 3
    %s206 = smul.u32 %s205, 8
    %s207 = sadd.s32 %s206, %s204
    %s208 = scalar_lea.vmem [#allocation8], %s207
    %v209 = vld [vmem:[%s208] ss:$8 sm:$0x7]
    %s210 = scalar_lea.vmem [#allocation2], 72
    %211 = vst.msk [vmem:[%s210] ss:$8 sm:$0x7] %vm132, %v209
    %212 = vst.msk [vmem:[%s210] ss:$8 sm:$0x0] %vm132, %v209
    %s213 = sld [smem:[#allocation5 + $0xb]]
    %s214 = sshra.s32 %s213, 3
    %s215 = sand.u32 %s213, 7
    %s216 = sshra.s32 %s213, 3
    %s217 = sand.u32 %s213, 7
    %s218 = smul.u32 %s214, 3
    %s219 = smul.u32 %s218, 8
    %s220 = sadd.s32 %s219, %s217
    %s221 = scalar_lea.vmem [#allocation8], %s220
    %v222 = vld [vmem:[%s221] ss:$8 sm:$0x7]
    %s223 = scalar_lea.vmem [#allocation2], 73
    %224 = vst.msk [vmem:[%s223] ss:$8 sm:$0x7] %vm132, %v222
    %225 = vst.msk [vmem:[%s223] ss:$8 sm:$0x0] %vm132, %v222
    %s226 = sld [smem:[#allocation5 + $0x4]]
    %s227 = sshra.s32 %s226, 3
    %s228 = sand.u32 %s226, 7
    %s229 = sshra.s32 %s226, 3
    %s230 = sand.u32 %s226, 7
    %s231 = smul.u32 %s227, 3
    %s232 = smul.u32 %s231, 8
    %s233 = sadd.s32 %s232, %s230
    %s234 = scalar_lea.vmem [#allocation8], %s233
    %v235 = vld [vmem:[%s234] ss:$8 sm:$0x7]
    %s236 = scalar_lea.vmem [#allocation2], 96
    %237 = vst.msk [vmem:[%s236] ss:$8 sm:$0x7] %vm132, %v235
    %238 = vst.msk [vmem:[%s236] ss:$8 sm:$0x0] %vm132, %v235
    %s239 = sld [smem:[#allocation5 + $0xc]]
    %s240 = sshra.s32 %s239, 3
    %s241 = sand.u32 %s239, 7
    %s242 = sshra.s32 %s239, 3
    %s243 = sand.u32 %s239, 7
    %s244 = smul.u32 %s240, 3
    %s245 = smul.u32 %s244, 8
    %s246 = sadd.s32 %s245, %s243
    %s247 = scalar_lea.vmem [#allocation8], %s246
    %v248 = vld [vmem:[%s247] ss:$8 sm:$0x7]
    %s249 = scalar_lea.vmem [#allocation2], 97
    %250 = vst.msk [vmem:[%s249] ss:$8 sm:$0x7] %vm132, %v248
    %251 = vst.msk [vmem:[%s249] ss:$8 sm:$0x0] %vm132, %v248
    %s252 = sld [smem:[#allocation5 + $0x5]]
    %s253 = sshra.s32 %s252, 3
    %s254 = sand.u32 %s252, 7
    %s255 = sshra.s32 %s252, 3
    %s256 = sand.u32 %s252, 7
    %s257 = smul.u32 %s253, 3
    %s258 = smul.u32 %s257, 8
    %s259 = sadd.s32 %s258, %s256
    %s260 = scalar_lea.vmem [#allocation8], %s259
    %v261 = vld [vmem:[%s260] ss:$8 sm:$0x7]
    %s262 = scalar_lea.vmem [#allocation2], 120
    %263 = vst.msk [vmem:[%s262] ss:$8 sm:$0x7] %vm132, %v261
    %264 = vst.msk [vmem:[%s262] ss:$8 sm:$0x0] %vm132, %v261
    %s265 = sld [smem:[#allocation5 + $0xd]]
    %s266 = sshra.s32 %s265, 3
    %s267 = sand.u32 %s265, 7
    %s268 = sshra.s32 %s265, 3
    %s269 = sand.u32 %s265, 7
    %s270 = smul.u32 %s266, 3
    %s271 = smul.u32 %s270, 8
    %s272 = sadd.s32 %s271, %s269
    %s273 = scalar_lea.vmem [#allocation8], %s272
    %v274 = vld [vmem:[%s273] ss:$8 sm:$0x7]
    %s275 = scalar_lea.vmem [#allocation2], 121
    %276 = vst.msk [vmem:[%s275] ss:$8 sm:$0x7] %vm132, %v274
    %277 = vst.msk [vmem:[%s275] ss:$8 sm:$0x0] %vm132, %v274
    %s278 = sld [smem:[#allocation5 + $0x6]]
    %s279 = sshra.s32 %s278, 3
    %s280 = sand.u32 %s278, 7
    %s281 = sshra.s32 %s278, 3
    %s282 = sand.u32 %s278, 7
    %s283 = smul.u32 %s279, 3
    %s284 = smul.u32 %s283, 8
    %s285 = sadd.s32 %s284, %s282
    %s286 = scalar_lea.vmem [#allocation8], %s285
    %v287 = vld [vmem:[%s286] ss:$8 sm:$0x7]
    %s288 = scalar_lea.vmem [#allocation2], 144
    %289 = vst.msk [vmem:[%s288] ss:$8 sm:$0x7] %vm132, %v287
    %290 = vst.msk [vmem:[%s288] ss:$8 sm:$0x0] %vm132, %v287
    %s291 = sld [smem:[#allocation5 + $0xe]]
    %s292 = sshra.s32 %s291, 3
    %s293 = sand.u32 %s291, 7
    %s294 = sshra.s32 %s291, 3
    %s295 = sand.u32 %s291, 7
    %s296 = smul.u32 %s292, 3
    %s297 = smul.u32 %s296, 8
    %s298 = sadd.s32 %s297, %s295
    %s299 = scalar_lea.vmem [#allocation8], %s298
    %v300 = vld [vmem:[%s299] ss:$8 sm:$0x7]
    %s301 = scalar_lea.vmem [#allocation2], 145
    %302 = vst.msk [vmem:[%s301] ss:$8 sm:$0x7] %vm132, %v300
    %303 = vst.msk [vmem:[%s301] ss:$8 sm:$0x0] %vm132, %v300
    %s304 = sld [smem:[#allocation5 + $0x7]]
    %s305 = sshra.s32 %s304, 3
    %s306 = sand.u32 %s304, 7
    %s307 = sshra.s32 %s304, 3
    %s308 = sand.u32 %s304, 7
    %s309 = smul.u32 %s305, 3
    %s310 = smul.u32 %s309, 8
    %s311 = sadd.s32 %s310, %s308
    %s312 = scalar_lea.vmem [#allocation8], %s311
    %v313 = vld [vmem:[%s312] ss:$8 sm:$0x7]
    %s314 = scalar_lea.vmem [#allocation2], 168
    %315 = vst.msk [vmem:[%s314] ss:$8 sm:$0x7] %vm132, %v313
    %316 = vst.msk [vmem:[%s314] ss:$8 sm:$0x0] %vm132, %v313
    %s317 = sld [smem:[#allocation5 + $0xf]]
    %s318 = sshra.s32 %s317, 3
    %s319 = sand.u32 %s317, 7
    %s320 = sshra.s32 %s317, 3
    %s321 = sand.u32 %s317, 7
    %s322 = smul.u32 %s318, 3
    %s323 = smul.u32 %s322, 8
    %s324 = sadd.s32 %s323, %s321
    %s325 = scalar_lea.vmem [#allocation8], %s324
    %v326 = vld [vmem:[%s325] ss:$8 sm:$0x7]
    %s327 = scalar_lea.vmem [#allocation2], 169
    %328 = vst.msk [vmem:[%s327] ss:$8 sm:$0x7] %vm132, %v326
    %329 = vst.msk [vmem:[%s327] ss:$8 sm:$0x0] %vm132, %v326
    %v330 = vld [vmem:[#allocation2] sm:$0xff]
    %v331 = vld [vmem:[#allocation2 + $0x8] sm:$0xff]
    %v332 = vld [vmem:[#allocation2 + $0x10] sm:$0xff]
    %v333 = vld [vmem:[#allocation2 + $0x18] sm:$0xff]
    %v334 = vld [vmem:[#allocation2 + $0x20] sm:$0xff]
    %v335 = vld [vmem:[#allocation2 + $0x28] sm:$0xff]
    %v336 = vld [vmem:[#allocation2 + $0x30] sm:$0xff]
    %v337 = vld [vmem:[#allocation2 + $0x38] sm:$0xff]
    %v338 = vld [vmem:[#allocation2 + $0x40] sm:$0xff]
    %v339 = vld [vmem:[#allocation2 + $0x48] sm:$0xff]
    %v340 = vld [vmem:[#allocation2 + $0x50] sm:$0xff]
    %v341 = vld [vmem:[#allocation2 + $0x58] sm:$0xff]
    %v342 = vld [vmem:[#allocation2 + $0x60] sm:$0xff]
    %v343 = vld [vmem:[#allocation2 + $0x68] sm:$0xff]
    %v344 = vld [vmem:[#allocation2 + $0x70] sm:$0xff]
    %v345 = vld [vmem:[#allocation2 + $0x78] sm:$0xff]
    %v346 = vld [vmem:[#allocation2 + $0x80] sm:$0xff]
    %v347 = vld [vmem:[#allocation2 + $0x88] sm:$0xff]
    %v348 = vld [vmem:[#allocation2 + $0x90] sm:$0xff]
    %v349 = vld [vmem:[#allocation2 + $0x98] sm:$0xff]
    %v350 = vld [vmem:[#allocation2 + $0xa0] sm:$0xff]
    %v351 = vld [vmem:[#allocation2 + $0xa8] sm:$0xff]
    %v352 = vld [vmem:[#allocation2 + $0xb0] sm:$0xff]
    %v353 = vld [vmem:[#allocation2 + $0xb8] sm:$0xff]
    %v354 = vpack.c.bf16 %v333, %v330
    %v355 = vpack.c.bf16 %v334, %v331
    %v356 = vpack.c.bf16 %v335, %v332
    %v357 = vpack.c.bf16 %v339, %v336
    %v358 = vpack.c.bf16 %v340, %v337
    %v359 = vpack.c.bf16 %v341, %v338
    %v360 = vpack.c.bf16 %v345, %v342
    %v361 = vpack.c.bf16 %v346, %v343
    %v362 = vpack.c.bf16 %v347, %v344
    %v363 = vpack.c.bf16 %v351, %v348
    %v364 = vpack.c.bf16 %v352, %v349
    %v365 = vpack.c.bf16 %v353, %v350
    %v366 = vld [vmem:[#allocation9] sm:$0xf]
    %v367 = vld [vmem:[#allocation9 + $0x4] sm:$0xf]
    %v368 = vld [vmem:[#allocation9 + $0x8] sm:$0xf]
    %v369 = vld [vmem:[#allocation9 + $0xc] sm:$0xf]
    %v370 = vld [vmem:[#allocation9 + $0x10] sm:$0xf]
    %v371 = vld [vmem:[#allocation9 + $0x14] sm:$0xf]
    %v372 = vld [vmem:[#allocation9 + $0x18] sm:$0xf]
    %v373 = vld [vmem:[#allocation9 + $0x1c] sm:$0xf]
    %v374 = vld [vmem:[#allocation9 + $0x20] sm:$0xf]
    %v375 = vld [vmem:[#allocation9 + $0x24] sm:$0xf]
    %v376 = vld [vmem:[#allocation9 + $0x28] sm:$0xf]
    %v377 = vld [vmem:[#allocation9 + $0x2c] sm:$0xf]
    %v378 = vld [vmem:[#allocation9 + $0x30] sm:$0xf]
    %v379 = vld [vmem:[#allocation9 + $0x34] sm:$0xf]
    %v380 = vld [vmem:[#allocation9 + $0x38] sm:$0xf]
    %v381 = vld [vmem:[#allocation9 + $0x3c] sm:$0xf]
    %v382 = vld [vmem:[#allocation9 + $0x40] sm:$0xf]
    %v383 = vld [vmem:[#allocation9 + $0x44] sm:$0xf]
    %v384 = vld [vmem:[#allocation9 + $0x48] sm:$0xf]
    %v385 = vld [vmem:[#allocation9 + $0x4c] sm:$0xf]
    %v386 = vld [vmem:[#allocation9 + $0x50] sm:$0xf]
    %v387 = vld [vmem:[#allocation9 + $0x54] sm:$0xf]
    %v388 = vld [vmem:[#allocation9 + $0x58] sm:$0xf]
    %v389 = vld [vmem:[#allocation9 + $0x5c] sm:$0xf]
    %v390 = vld [vmem:[#allocation9 + $0x60] sm:$0xf]
    %v391 = vld [vmem:[#allocation9 + $0x64] sm:$0xf]
    %v392 = vld [vmem:[#allocation9 + $0x68] sm:$0xf]
    %v393 = vld [vmem:[#allocation9 + $0x6c] sm:$0xf]
    %v394 = vld [vmem:[#allocation9 + $0x70] sm:$0xf]
    %v395 = vld [vmem:[#allocation9 + $0x74] sm:$0xf]
    %v396 = vld [vmem:[#allocation9 + $0x78] sm:$0xf]
    %v397 = vld [vmem:[#allocation9 + $0x7c] sm:$0xf]
    %v398 = vld [vmem:[#allocation9 + $0x80] sm:$0xf]
    %v399 = vld [vmem:[#allocation9 + $0x84] sm:$0xf]
    %v400 = vld [vmem:[#allocation9 + $0x88] sm:$0xf]
    %v401 = vld [vmem:[#allocation9 + $0x8c] sm:$0xf]
    %v402 = vld [vmem:[#allocation9 + $0x90] sm:$0xf]
    %v403 = vld [vmem:[#allocation9 + $0x94] sm:$0xf]
    %v404 = vld [vmem:[#allocation9 + $0x98] sm:$0xf]
    %v405 = vld [vmem:[#allocation9 + $0x9c] sm:$0xf]
    %v406 = vld [vmem:[#allocation9 + $0xa0] sm:$0xf]
    %v407 = vld [vmem:[#allocation9 + $0xa4] sm:$0xf]
    %v408 = vld [vmem:[#allocation9 + $0xa8] sm:$0xf]
    %v409 = vld [vmem:[#allocation9 + $0xac] sm:$0xf]
    %v410 = vld [vmem:[#allocation9 + $0xb0] sm:$0xf]
    %v411 = vld [vmem:[#allocation9 + $0xb4] sm:$0xf]
    %v412 = vld [vmem:[#allocation9 + $0xb8] sm:$0xf]
    %v413 = vld [vmem:[#allocation9 + $0xbc] sm:$0xf]
    %v414 = vld [vmem:[%s4] sm:$0x1]
    %v416 = vlaneseq
    %v417 = vshrl.u32 %v416, 7
    %v418 = vsub.s32 0, %v417
    %v419 = vrot.slane %v414, %v418
    %v469 = vunpack.c.l.b16 %v366
    %v470 = vunpack.c.l.b16 %v367
    %v471 = vunpack.c.l.b16 %v368
    %v472 = vunpack.c.l.b16 %v369
    %v473 = vunpack.c.l.b16 %v370
    %v474 = vunpack.c.l.b16 %v371
    %v475 = vunpack.c.l.b16 %v372
    %v476 = vunpack.c.l.b16 %v373
    %v477 = vunpack.c.l.b16 %v374
    %v478 = vunpack.c.l.b16 %v375
    %v479 = vunpack.c.l.b16 %v376
    %v480 = vunpack.c.l.b16 %v377
    %v481 = vunpack.c.l.b16 %v378
    %v482 = vunpack.c.l.b16 %v379
    %v483 = vunpack.c.l.b16 %v380
    %v484 = vunpack.c.l.b16 %v381
    %v485 = vunpack.c.l.b16 %v382
    %v486 = vunpack.c.l.b16 %v383
    %v487 = vunpack.c.l.b16 %v384
    %v488 = vunpack.c.l.b16 %v385
    %v489 = vunpack.c.l.b16 %v386
    %v490 = vunpack.c.l.b16 %v387
    %v491 = vunpack.c.l.b16 %v388
    %v492 = vunpack.c.l.b16 %v389
    %v493 = vunpack.c.l.b16 %v390
    %v494 = vunpack.c.l.b16 %v391
    %v495 = vunpack.c.l.b16 %v392
    %v496 = vunpack.c.l.b16 %v393
    %v497 = vunpack.c.l.b16 %v394
    %v498 = vunpack.c.l.b16 %v395
    %v499 = vunpack.c.l.b16 %v396
    %v500 = vunpack.c.l.b16 %v397
    %v501 = vunpack.c.l.b16 %v398
    %v502 = vunpack.c.l.b16 %v399
    %v503 = vunpack.c.l.b16 %v400
    %v504 = vunpack.c.l.b16 %v401
    %v505 = vunpack.c.l.b16 %v402
    %v506 = vunpack.c.l.b16 %v403
    %v507 = vunpack.c.l.b16 %v404
    %v508 = vunpack.c.l.b16 %v405
    %v509 = vunpack.c.l.b16 %v406
    %v510 = vunpack.c.l.b16 %v407
    %v511 = vunpack.c.l.b16 %v408
    %v512 = vunpack.c.l.b16 %v409
    %v513 = vunpack.c.l.b16 %v410
    %v514 = vunpack.c.l.b16 %v411
    %v515 = vunpack.c.l.b16 %v412
    %v516 = vunpack.c.l.b16 %v413
    %v517 = vpack.c.b16 %v470, %v469
    %v518 = vpack.c.b16 %v472, %v471
    %v519 = vpack.c.b16 %v474, %v473
    %v520 = vpack.c.b16 %v476, %v475
    %v521 = vpack.c.b16 %v478, %v477
    %v522 = vpack.c.b16 %v480, %v479
    %v523 = vpack.c.b16 %v482, %v481
    %v524 = vpack.c.b16 %v484, %v483
    %v525 = vpack.c.b16 %v486, %v485
    %v526 = vpack.c.b16 %v488, %v487
    %v527 = vpack.c.b16 %v490, %v489
    %v528 = vpack.c.b16 %v492, %v491
    %v529 = vpack.c.b16 %v494, %v493
    %v530 = vpack.c.b16 %v496, %v495
    %v531 = vpack.c.b16 %v498, %v497
    %v532 = vpack.c.b16 %v500, %v499
    %v533 = vpack.c.b16 %v502, %v501
    %v534 = vpack.c.b16 %v504, %v503
    %v535 = vpack.c.b16 %v506, %v505
    %v536 = vpack.c.b16 %v508, %v507
    %v537 = vpack.c.b16 %v510, %v509
    %v538 = vpack.c.b16 %v512, %v511
    %v539 = vpack.c.b16 %v514, %v513
    %v540 = vpack.c.b16 %v516, %v515
    %565 = vmatprep.subr.bf16.mxu0 0
    %566 = vmatpush1.bf16.msra.mxu0 %v517
    %567 = vmatprep.subr.bf16.mxu0 0
    %568 = vmatpush1.bf16.msra.mxu0 %v518
    %569 = vmatprep.subr.bf16.mxu0 0
    %570 = vmatpush1.bf16.msra.mxu0 %v519
    %571 = vmatprep.subr.bf16.mxu0 0
    %572 = vmatpush1.bf16.msra.mxu0 %v520
    %573 = vmatprep.subr.bf16.mxu0 0
    %574 = vmatpush1.bf16.msra.mxu0 %v521
    %575 = vmatprep.subr.bf16.mxu0 0
    %576 = vmatpush1.bf16.msra.mxu0 %v522
    %577 = vmatprep.subr.bf16.mxu0 0
    %578 = vmatpush1.bf16.msra.mxu0 %v523
    %579 = vmatprep.subr.bf16.mxu0 0
    %580 = vmatpush1.bf16.msra.mxu0 %v524
    %581 = vmatprep.subr.bf16.mxu0 0
    %582 = vmatpush1.bf16.msra.mxu0 %v525
    %583 = vmatprep.subr.bf16.mxu0 0
    %584 = vmatpush1.bf16.msra.mxu0 %v526
    %585 = vmatprep.subr.bf16.mxu0 0
    %586 = vmatpush1.bf16.msra.mxu0 %v527
    %587 = vmatprep.subr.bf16.mxu0 0
    %588 = vmatpush1.bf16.msra.mxu0 %v528
    %589 = vmatprep.subr.bf16.mxu0 0
    %590 = vmatpush1.bf16.msra.mxu0 %v529
    %591 = vmatprep.subr.bf16.mxu0 0
    %592 = vmatpush1.bf16.msra.mxu0 %v530
    %593 = vmatprep.subr.bf16.mxu0 0
    %594 = vmatpush1.bf16.msra.mxu0 %v531
    %595 = vmatprep.subr.bf16.mxu0 0
    %596 = vmatpush1.bf16.msra.mxu0 %v532
    %597 = vmatprep.mubr.bf16.mxu0 %v355
    %598 = vmatmul.mubr.bf16.gmra.mrb[0].mxu0 %v354
    %v599 = vpop.f32.mrb[0].mxu0
    %v600 = vadd.f32 %v419, %v599
    %v601 = vpop.f32.mrb[0].mxu0
    %v602 = vpop.f32.mrb[0].mxu0
    %v603 = vadd.f32 %v419, %v602
    %v604 = vpop.f32.mrb[0].mxu0
    %605 = vmatprep.mubr.bf16.mxu0 %v358
    %606 = vmatmul.mubr.bf16.gmra.mrb[0].mxu0 %v357
    %v607 = vpop.f32.mrb[0].mxu0
    %v608 = vadd.f32 %v419, %v607
    %v609 = vpop.f32.mrb[0].mxu0
    %v610 = vpop.f32.mrb[0].mxu0
    %v611 = vadd.f32 %v419, %v610
    %v612 = vpop.f32.mrb[0].mxu0
    %613 = vmatprep.mubr.bf16.mxu0 %v361
    %614 = vmatmul.mubr.bf16.gmra.mrb[0].mxu0 %v360
    %v615 = vpop.f32.mrb[0].mxu0
    %v616 = vadd.f32 %v419, %v615
    %v617 = vpop.f32.mrb[0].mxu0
    %v618 = vpop.f32.mrb[0].mxu0
    %v619 = vadd.f32 %v419, %v618
    %v620 = vpop.f32.mrb[0].mxu0
    %621 = vmatprep.mubr.bf16.mxu0 %v364
    %622 = vmatmul.mubr.bf16.gmra.mrb[0].mxu0 %v363
    %v623 = vpop.f32.mrb[0].mxu0
    %v624 = vadd.f32 %v419, %v623
    %v625 = vpop.f32.mrb[0].mxu0
    %v626 = vpop.f32.mrb[0].mxu0
    %v627 = vadd.f32 %v419, %v626
    %v628 = vpop.f32.mrb[0].mxu0
    %629 = vdwg.mxu0
    %630 = vmatprep.subr.bf16.mxu0 0
    %631 = vmatpush1.bf16.msra.mxu0 %v533
    %632 = vmatprep.subr.bf16.mxu0 0
    %633 = vmatpush1.bf16.msra.mxu0 %v534
    %634 = vmatprep.subr.bf16.mxu0 0
    %635 = vmatpush1.bf16.msra.mxu0 %v535
    %636 = vmatprep.subr.bf16.mxu0 0
    %637 = vmatpush1.bf16.msra.mxu0 %v536
    %638 = vmatprep.subr.bf16.mxu0 0
    %639 = vmatpush1.bf16.msra.mxu0 %v537
    %640 = vmatprep.subr.bf16.mxu0 0
    %641 = vmatpush1.bf16.msra.mxu0 %v538
    %642 = vmatprep.subr.bf16.mxu0 0
    %643 = vmatpush1.bf16.msra.mxu0 %v539
    %644 = vmatprep.subr.bf16.mxu0 0
    %645 = vmatpush1.bf16.msra.mxu0 %v540
    %646 = vmatprep.subr.bf16.mxu0 0
    %647 = vmatpush1.bf16.msra.mxu0 0
    %648 = vmatprep.subr.bf16.mxu0 0
    %649 = vmatpush1.bf16.msra.mxu0 0
    %650 = vmatprep.subr.bf16.mxu0 0
    %651 = vmatpush1.bf16.msra.mxu0 0
    %652 = vmatprep.subr.bf16.mxu0 0
    %653 = vmatpush1.bf16.msra.mxu0 0
    %654 = vmatprep.subr.bf16.mxu0 0
    %655 = vmatpush1.bf16.msra.mxu0 0
    %656 = vmatprep.subr.bf16.mxu0 0
    %657 = vmatpush1.bf16.msra.mxu0 0
    %658 = vmatprep.subr.bf16.mxu0 0
    %659 = vmatpush1.bf16.msra.mxu0 0
    %660 = vmatprep.subr.bf16.mxu0 0
    %661 = vmatpush1.bf16.msra.mxu0 0
    %662 = vmatprep.mubr.bf16.mxu0 0
    %663 = vmatmul.mubr.bf16.gmra.mrb[0].mxu0 %v356
    %v664 = vpop.f32.mrb[0].mxu0
    %v665 = vadd.f32 %v600, %v664
    %v666 = vpop.f32.mrb[0].mxu0
    %v667 = vpop.f32.mrb[0].mxu0
    %v668 = vadd.f32 %v603, %v667
    %v669 = vpop.f32.mrb[0].mxu0
    %670 = vmatprep.mubr.bf16.mxu0 0
    %671 = vmatmul.mubr.bf16.gmra.mrb[0].mxu0 %v359
    %v672 = vpop.f32.mrb[0].mxu0
    %v673 = vadd.f32 %v608, %v672
    %v674 = vpop.f32.mrb[0].mxu0
    %v675 = vpop.f32.mrb[0].mxu0
    %v676 = vadd.f32 %v611, %v675
    %v677 = vpop.f32.mrb[0].mxu0
    %678 = vmatprep.mubr.bf16.mxu0 0
    %679 = vmatmul.mubr.bf16.gmra.mrb[0].mxu0 %v362
    %v680 = vpop.f32.mrb[0].mxu0
    %v681 = vadd.f32 %v616, %v680
    %v682 = vpop.f32.mrb[0].mxu0
    %v683 = vpop.f32.mrb[0].mxu0
    %v684 = vadd.f32 %v619, %v683
    %v685 = vpop.f32.mrb[0].mxu0
    %686 = vmatprep.mubr.bf16.mxu0 0
    %687 = vmatmul.mubr.bf16.gmra.mrb[0].mxu0 %v365
    %v688 = vpop.f32.mrb[0].mxu0
    %v689 = vadd.f32 %v624, %v688
    %v690 = vpop.f32.mrb[0].mxu0
    %v691 = vpop.f32.mrb[0].mxu0
    %v692 = vadd.f32 %v627, %v691
    %v693 = vpop.f32.mrb[0].mxu0
    %694 = vdwg.mxu0
    %695 = vst [vmem:[#allocation3] sm:$0xff] %v665
    %696 = vst [vmem:[#allocation3 + $0x8] sm:$0xff] %v668
    %697 = vst [vmem:[#allocation3 + $0x10] sm:$0xff] %v673
    %698 = vst [vmem:[#allocation3 + $0x18] sm:$0xff] %v676
    %699 = vst [vmem:[#allocation3 + $0x20] sm:$0xff] %v681
    %700 = vst [vmem:[#allocation3 + $0x28] sm:$0xff] %v684
    %701 = vst [vmem:[#allocation3 + $0x30] sm:$0xff] %v689
    %702 = vst [vmem:[#allocation3 + $0x38] sm:$0xff] %v692
    %v703 = vld [vmem:[#allocation11] sm:$0xf]
    %v704 = vld [vmem:[#allocation11 + $0x4] sm:$0xf]
    %v705 = vld [vmem:[#allocation11 + $0x8] sm:$0xf]
    %v706 = vld [vmem:[#allocation11 + $0xc] sm:$0xf]
    %v707 = vld [vmem:[#allocation3] sm:$0xff]
    %v712 = vunpack.c.l.b16 %v703
    %v713 = vunpack.c.l.b16 %v704
    %v714 = vunpack.c.l.b16 %v705
    %v715 = vunpack.c.l.b16 %v706
    %v716 = vpack.c.b16 %v713, %v712
    %v717 = vpack.c.b16 %v715, %v714
    %vm720 = vcmask 261120
    %v722 = vsel %vm720, 0, 0
    %724 = vmatprep.subr.bf16.mxu0 0
    %725 = vmatpush1.bf16.msra.mxu0 %v716
    %726 = vmatprep.subr.bf16.mxu0 0
    %727 = vmatpush1.bf16.msra.mxu0 %v717
    %728 = vmatprep.subr.bf16.mxu0 0
    %729 = vmatpush1.bf16.msra.mxu0 0
    %730 = vmatprep.subr.bf16.mxu0 0
    %731 = vmatpush1.bf16.msra.mxu0 0
    %732 = vmatprep.subr.bf16.mxu0 0
    %733 = vmatpush1.bf16.msra.mxu0 0
    %734 = vmatprep.subr.bf16.mxu0 0
    %735 = vmatpush1.bf16.msra.mxu0 0
    %736 = vmatprep.subr.bf16.mxu0 0
    %737 = vmatpush1.bf16.msra.mxu0 0
    %738 = vmatprep.subr.bf16.mxu0 0
    %739 = vmatpush1.bf16.msra.mxu0 0
    %740 = vmatprep.subr.bf16.mxu0 0
    %741 = vmatpush1.bf16.msra.mxu0 0
    %742 = vmatprep.subr.bf16.mxu0 0
    %743 = vmatpush1.bf16.msra.mxu0 0
    %744 = vmatprep.subr.bf16.mxu0 0
    %745 = vmatpush1.bf16.msra.mxu0 0
    %746 = vmatprep.subr.bf16.mxu0 0
    %747 = vmatpush1.bf16.msra.mxu0 0
    %748 = vmatprep.subr.bf16.mxu0 0
    %749 = vmatpush1.bf16.msra.mxu0 0
    %750 = vmatprep.subr.bf16.mxu0 0
    %751 = vmatpush1.bf16.msra.mxu0 0
    %752 = vmatprep.subr.bf16.mxu0 0
    %753 = vmatpush1.bf16.msra.mxu0 0
    %754 = vmatprep.subr.bf16.mxu0 0
    %755 = vmatpush1.bf16.msra.mxu0 0
    %756 = vmatprep.mubr.bf16.mxu0 0
    %757 = vmatmul.mubr.bf16.gmra.mrb[0].mxu0 %v722
    %v758 = vpop.f32.mrb[0].mxu0
    %v759 = vadd.f32 0.0, %v758
    %v760 = vpop.f32.mrb[0].mxu0
    %v761 = vpop.f32.mrb[0].mxu0
    %v762 = vpop.f32.mrb[0].mxu0
    %763 = vdwg.mxu0
    %v764 = vadd.f32 %v707, %v759
    %v765 = vmul.f32 %v764, 0.5
    %v766 = vtanh.pop %v765
    %v767 = vmul.f32 %v766, 0.5
    %v768 = vadd.f32 %v767, 0.5
    %v769 = vtanh.pop %v764
    %v770 = vmul.f32 %v768, 0.0
    %772 = vrot.lane.b32.xlu0 %v769, 64
    %v773 = vpop.permute.xlu0 %772
    %v775 = vmul.f32 %v768, %v773
    %777 = vrot.lane.b32.xlu0 %v775, 32
    %v778 = vpop.permute.xlu0 %777
    %v780 = vadd.f32 %v770, %v778
    %v781 = vtanh.pop %v780
    %783 = vrot.lane.b32.xlu0 %v781, 64
    %v784 = vpop.permute.xlu0 %783
    %v786 = vmul.f32 %v768, %v784
    %788 = vrot.lane.b32.xlu0 %v786, 32
    %v789 = vpop.permute.xlu0 %788
    %791 = vst.msk [vmem:[#allocation4] sm:$0xff] %vm720, %v789
    %v792 = vld [vmem:[#allocation3 + $0x8] sm:$0xff]
    %v793 = vpack.c.bf16 %v786, %v786
    %795 = vrot.lane.b32.xlu0 %v793, 32
    %v796 = vpop.permute.xlu0 %795
    %v798 = vsel %vm720, %v796, 0
    %800 = vmatprep.subr.bf16.mxu0 0
    %801 = vmatpush1.bf16.msra.mxu0 %v716
    %802 = vmatprep.subr.bf16.mxu0 0
    %803 = vmatpush1.bf16.msra.mxu0 %v717
    %804 = vmatprep.subr.bf16.mxu0 0
    %805 = vmatpush1.bf16.msra.mxu0 0
    %806 = vmatprep.subr.bf16.mxu0 0
    %807 = vmatpush1.bf16.msra.mxu0 0
    %808 = vmatprep.subr.bf16.mxu0 0
    %809 = vmatpush1.bf16.msra.mxu0 0
    %810 = vmatprep.subr.bf16.mxu0 0
    %811 = vmatpush1.bf16.msra.mxu0 0
    %812 = vmatprep.subr.bf16.mxu0 0
    %813 = vmatpush1.bf16.msra.mxu0 0
    %814 = vmatprep.subr.bf16.mxu0 0
    %815 = vmatpush1.bf16.msra.mxu0 0
    %816 = vmatprep.subr.bf16.mxu0 0
    %817 = vmatpush1.bf16.msra.mxu0 0
    %818 = vmatprep.subr.bf16.mxu0 0
    %819 = vmatpush1.bf16.msra.mxu0 0
    %820 = vmatprep.subr.bf16.mxu0 0
    %821 = vmatpush1.bf16.msra.mxu0 0
    %822 = vmatprep.subr.bf16.mxu0 0
    %823 = vmatpush1.bf16.msra.mxu0 0
    %824 = vmatprep.subr.bf16.mxu0 0
    %825 = vmatpush1.bf16.msra.mxu0 0
    %826 = vmatprep.subr.bf16.mxu0 0
    %827 = vmatpush1.bf16.msra.mxu0 0
    %828 = vmatprep.subr.bf16.mxu0 0
    %829 = vmatpush1.bf16.msra.mxu0 0
    %830 = vmatprep.subr.bf16.mxu0 0
    %831 = vmatpush1.bf16.msra.mxu0 0
    %832 = vmatprep.mubr.bf16.mxu0 0
    %833 = vmatmul.mubr.bf16.gmra.mrb[0].mxu0 %v798
    %v834 = vpop.f32.mrb[0].mxu0
    %v835 = vadd.f32 0.0, %v834
    %v836 = vpop.f32.mrb[0].mxu0
    %v837 = vpop.f32.mrb[0].mxu0
    %v838 = vpop.f32.mrb[0].mxu0
    %839 = vdwg.mxu0
    %v840 = vadd.f32 %v792, %v835
    %v841 = vmul.f32 %v840, 0.5
    %v842 = vtanh.pop %v841
    %v843 = vmul.f32 %v842, 0.5
    %v844 = vadd.f32 %v843, 0.5
    %v845 = vtanh.pop %v840
    %v846 = vmul.f32 %v844, %v780
    %848 = vrot.lane.b32.xlu0 %v845, 64
    %v849 = vpop.permute.xlu0 %848
    %v851 = vmul.f32 %v844, %v849
    %853 = vrot.lane.b32.xlu0 %v851, 32
    %v854 = vpop.permute.xlu0 %853
    %v856 = vadd.f32 %v846, %v854
    %v857 = vtanh.pop %v856
    %859 = vrot.lane.b32.xlu0 %v857, 64
    %v860 = vpop.permute.xlu0 %859
    %v862 = vmul.f32 %v844, %v860
    %864 = vrot.lane.b32.xlu0 %v862, 32
    %v865 = vpop.permute.xlu0 %864
    %867 = vst.msk [vmem:[#allocation4 + $0x8] sm:$0xff] %vm720, %v865
    %v868 = vld [vmem:[#allocation3 + $0x10] sm:$0xff]
    %v869 = vpack.c.bf16 %v862, %v862
    %871 = vrot.lane.b32.xlu0 %v869, 32
    %v872 = vpop.permute.xlu0 %871
    %v874 = vsel %vm720, %v872, 0
    %876 = vmatprep.subr.bf16.mxu0 0
    %877 = vmatpush1.bf16.msra.mxu0 %v716
    %878 = vmatprep.subr.bf16.mxu0 0
    %879 = vmatpush1.bf16.msra.mxu0 %v717
    %880 = vmatprep.subr.bf16.mxu0 0
    %881 = vmatpush1.bf16.msra.mxu0 0
    %882 = vmatprep.subr.bf16.mxu0 0
    %883 = vmatpush1.bf16.msra.mxu0 0
    %884 = vmatprep.subr.bf16.mxu0 0
    %885 = vmatpush1.bf16.msra.mxu0 0
    %886 = vmatprep.subr.bf16.mxu0 0
    %887 = vmatpush1.bf16.msra.mxu0 0
    %888 = vmatprep.subr.bf16.mxu0 0
    %889 = vmatpush1.bf16.msra.mxu0 0
    %890 = vmatprep.subr.bf16.mxu0 0
    %891 = vmatpush1.bf16.msra.mxu0 0
    %892 = vmatprep.subr.bf16.mxu0 0
    %893 = vmatpush1.bf16.msra.mxu0 0
    %894 = vmatprep.subr.bf16.mxu0 0
    %895 = vmatpush1.bf16.msra.mxu0 0
    %896 = vmatprep.subr.bf16.mxu0 0
    %897 = vmatpush1.bf16.msra.mxu0 0
    %898 = vmatprep.subr.bf16.mxu0 0
    %899 = vmatpush1.bf16.msra.mxu0 0
    %900 = vmatprep.subr.bf16.mxu0 0
    %901 = vmatpush1.bf16.msra.mxu0 0
    %902 = vmatprep.subr.bf16.mxu0 0
    %903 = vmatpush1.bf16.msra.mxu0 0
    %904 = vmatprep.subr.bf16.mxu0 0
    %905 = vmatpush1.bf16.msra.mxu0 0
    %906 = vmatprep.subr.bf16.mxu0 0
    %907 = vmatpush1.bf16.msra.mxu0 0
    %908 = vmatprep.mubr.bf16.mxu0 0
    %909 = vmatmul.mubr.bf16.gmra.mrb[0].mxu0 %v874
    %v910 = vpop.f32.mrb[0].mxu0
    %v911 = vadd.f32 0.0, %v910
    %v912 = vpop.f32.mrb[0].mxu0
    %v913 = vpop.f32.mrb[0].mxu0
    %v914 = vpop.f32.mrb[0].mxu0
    %915 = vdwg.mxu0
    %v916 = vadd.f32 %v868, %v911
    %v917 = vmul.f32 %v916, 0.5
    %v918 = vtanh.pop %v917
    %v919 = vmul.f32 %v918, 0.5
    %v920 = vadd.f32 %v919, 0.5
    %v921 = vtanh.pop %v916
    %v922 = vmul.f32 %v920, %v856
    %924 = vrot.lane.b32.xlu0 %v921, 64
    %v925 = vpop.permute.xlu0 %924
    %v927 = vmul.f32 %v920, %v925
    %929 = vrot.lane.b32.xlu0 %v927, 32
    %v930 = vpop.permute.xlu0 %929
    %v932 = vadd.f32 %v922, %v930
    %v933 = vtanh.pop %v932
    %935 = vrot.lane.b32.xlu0 %v933, 64
    %v936 = vpop.permute.xlu0 %935
    %v938 = vmul.f32 %v920, %v936
    %940 = vrot.lane.b32.xlu0 %v938, 32
    %v941 = vpop.permute.xlu0 %940
    %943 = vst.msk [vmem:[#allocation4 + $0x10] sm:$0xff] %vm720, %v941
    %v944 = vld [vmem:[#allocation3 + $0x18] sm:$0xff]
    %v945 = vpack.c.bf16 %v938, %v938
    %947 = vrot.lane.b32.xlu0 %v945, 32
    %v948 = vpop.permute.xlu0 %947
    %v950 = vsel %vm720, %v948, 0
    %952 = vmatprep.subr.bf16.mxu0 0
    %953 = vmatpush1.bf16.msra.mxu0 %v716
    %954 = vmatprep.subr.bf16.mxu0 0
    %955 = vmatpush1.bf16.msra.mxu0 %v717
    %956 = vmatprep.subr.bf16.mxu0 0
    %957 = vmatpush1.bf16.msra.mxu0 0
    %958 = vmatprep.subr.bf16.mxu0 0
    %959 = vmatpush1.bf16.msra.mxu0 0
    %960 = vmatprep.subr.bf16.mxu0 0
    %961 = vmatpush1.bf16.msra.mxu0 0
    %962 = vmatprep.subr.bf16.mxu0 0
    %963 = vmatpush1.bf16.msra.mxu0 0
    %964 = vmatprep.subr.bf16.mxu0 0
    %965 = vmatpush1.bf16.msra.mxu0 0
    %966 = vmatprep.subr.bf16.mxu0 0
    %967 = vmatpush1.bf16.msra.mxu0 0
    %968 = vmatprep.subr.bf16.mxu0 0
    %969 = vmatpush1.bf16.msra.mxu0 0
    %970 = vmatprep.subr.bf16.mxu0 0
    %971 = vmatpush1.bf16.msra.mxu0 0
    %972 = vmatprep.subr.bf16.mxu0 0
    %973 = vmatpush1.bf16.msra.mxu0 0
    %974 = vmatprep.subr.bf16.mxu0 0
    %975 = vmatpush1.bf16.msra.mxu0 0
    %976 = vmatprep.subr.bf16.mxu0 0
    %977 = vmatpush1.bf16.msra.mxu0 0
    %978 = vmatprep.subr.bf16.mxu0 0
    %979 = vmatpush1.bf16.msra.mxu0 0
    %980 = vmatprep.subr.bf16.mxu0 0
    %981 = vmatpush1.bf16.msra.mxu0 0
    %982 = vmatprep.subr.bf16.mxu0 0
    %983 = vmatpush1.bf16.msra.mxu0 0
    %984 = vmatprep.mubr.bf16.mxu0 0
    %985 = vmatmul.mubr.bf16.gmra.mrb[0].mxu0 %v950
    %v986 = vpop.f32.mrb[0].mxu0
    %v987 = vadd.f32 0.0, %v986
    %v988 = vpop.f32.mrb[0].mxu0
    %v989 = vpop.f32.mrb[0].mxu0
    %v990 = vpop.f32.mrb[0].mxu0
    %991 = vdwg.mxu0
    %v992 = vadd.f32 %v944, %v987
    %v993 = vmul.f32 %v992, 0.5
    %v994 = vtanh.pop %v993
    %v995 = vmul.f32 %v994, 0.5
    %v996 = vadd.f32 %v995, 0.5
    %v997 = vtanh.pop %v992
    %v998 = vmul.f32 %v996, %v932
    %1000 = vrot.lane.b32.xlu0 %v997, 64
    %v1001 = vpop.permute.xlu0 %1000
    %v1003 = vmul.f32 %v996, %v1001
    %1005 = vrot.lane.b32.xlu0 %v1003, 32
    %v1006 = vpop.permute.xlu0 %1005
    %v1008 = vadd.f32 %v998, %v1006
    %v1009 = vtanh.pop %v1008
    %1011 = vrot.lane.b32.xlu0 %v1009, 64
    %v1012 = vpop.permute.xlu0 %1011
    %v1014 = vmul.f32 %v996, %v1012
    %1016 = vrot.lane.b32.xlu0 %v1014, 32
    %v1017 = vpop.permute.xlu0 %1016
    %1019 = vst.msk [vmem:[#allocation4 + $0x18] sm:$0xff] %vm720, %v1017
    %v1020 = vld [vmem:[#allocation3 + $0x20] sm:$0xff]
    %v1021 = vpack.c.bf16 %v1014, %v1014
    %1023 = vrot.lane.b32.xlu0 %v1021, 32
    %v1024 = vpop.permute.xlu0 %1023
    %v1026 = vsel %vm720, %v1024, 0
    %1028 = vmatprep.subr.bf16.mxu0 0
    %1029 = vmatpush1.bf16.msra.mxu0 %v716
    %1030 = vmatprep.subr.bf16.mxu0 0
    %1031 = vmatpush1.bf16.msra.mxu0 %v717
    %1032 = vmatprep.subr.bf16.mxu0 0
    %1033 = vmatpush1.bf16.msra.mxu0 0
    %1034 = vmatprep.subr.bf16.mxu0 0
    %1035 = vmatpush1.bf16.msra.mxu0 0
    %1036 = vmatprep.subr.bf16.mxu0 0
    %1037 = vmatpush1.bf16.msra.mxu0 0
    %1038 = vmatprep.subr.bf16.mxu0 0
    %1039 = vmatpush1.bf16.msra.mxu0 0
    %1040 = vmatprep.subr.bf16.mxu0 0
    %1041 = vmatpush1.bf16.msra.mxu0 0
    %1042 = vmatprep.subr.bf16.mxu0 0
    %1043 = vmatpush1.bf16.msra.mxu0 0
    %1044 = vmatprep.subr.bf16.mxu0 0
    %1045 = vmatpush1.bf16.msra.mxu0 0
    %1046 = vmatprep.subr.bf16.mxu0 0
    %1047 = vmatpush1.bf16.msra.mxu0 0
    %1048 = vmatprep.subr.bf16.mxu0 0
    %1049 = vmatpush1.bf16.msra.mxu0 0
    %1050 = vmatprep.subr.bf16.mxu0 0
    %1051 = vmatpush1.bf16.msra.mxu0 0
    %1052 = vmatprep.subr.bf16.mxu0 0
    %1053 = vmatpush1.bf16.msra.mxu0 0
    %1054 = vmatprep.subr.bf16.mxu0 0
    %1055 = vmatpush1.bf16.msra.mxu0 0
    %1056 = vmatprep.subr.bf16.mxu0 0
    %1057 = vmatpush1.bf16.msra.mxu0 0
    %1058 = vmatprep.subr.bf16.mxu0 0
    %1059 = vmatpush1.bf16.msra.mxu0 0
    %1060 = vmatprep.mubr.bf16.mxu0 0
    %1061 = vmatmul.mubr.bf16.gmra.mrb[0].mxu0 %v1026
    %v1062 = vpop.f32.mrb[0].mxu0
    %v1063 = vadd.f32 0.0, %v1062
    %v1064 = vpop.f32.mrb[0].mxu0
    %v1065 = vpop.f32.mrb[0].mxu0
    %v1066 = vpop.f32.mrb[0].mxu0
    %1067 = vdwg.mxu0
    %v1068 = vadd.f32 %v1020, %v1063
    %v1069 = vmul.f32 %v1068, 0.5
    %v1070 = vtanh.pop %v1069
    %v1071 = vmul.f32 %v1070, 0.5
    %v1072 = vadd.f32 %v1071, 0.5
    %v1073 = vtanh.pop %v1068
    %v1074 = vmul.f32 %v1072, %v1008
    %1076 = vrot.lane.b32.xlu0 %v1073, 64
    %v1077 = vpop.permute.xlu0 %1076
    %v1079 = vmul.f32 %v1072, %v1077
    %1081 = vrot.lane.b32.xlu0 %v1079, 32
    %v1082 = vpop.permute.xlu0 %1081
    %v1084 = vadd.f32 %v1074, %v1082
    %v1085 = vtanh.pop %v1084
    %1087 = vrot.lane.b32.xlu0 %v1085, 64
    %v1088 = vpop.permute.xlu0 %1087
    %v1090 = vmul.f32 %v1072, %v1088
    %1092 = vrot.lane.b32.xlu0 %v1090, 32
    %v1093 = vpop.permute.xlu0 %1092
    %1095 = vst.msk [vmem:[#allocation4 + $0x20] sm:$0xff] %vm720, %v1093
    %v1096 = vld [vmem:[#allocation3 + $0x28] sm:$0xff]
    %v1097 = vpack.c.bf16 %v1090, %v1090
    %1099 = vrot.lane.b32.xlu0 %v1097, 32
    %v1100 = vpop.permute.xlu0 %1099
    %v1102 = vsel %vm720, %v1100, 0
    %1104 = vmatprep.subr.bf16.mxu0 0
    %1105 = vmatpush1.bf16.msra.mxu0 %v716
    %1106 = vmatprep.subr.bf16.mxu0 0
    %1107 = vmatpush1.bf16.msra.mxu0 %v717
    %1108 = vmatprep.subr.bf16.mxu0 0
    %1109 = vmatpush1.bf16.msra.mxu0 0
    %1110 = vmatprep.subr.bf16.mxu0 0
    %1111 = vmatpush1.bf16.msra.mxu0 0
    %1112 = vmatprep.subr.bf16.mxu0 0
    %1113 = vmatpush1.bf16.msra.mxu0 0
    %1114 = vmatprep.subr.bf16.mxu0 0
    %1115 = vmatpush1.bf16.msra.mxu0 0
    %1116 = vmatprep.subr.bf16.mxu0 0
    %1117 = vmatpush1.bf16.msra.mxu0 0
    %1118 = vmatprep.subr.bf16.mxu0 0
    %1119 = vmatpush1.bf16.msra.mxu0 0
    %1120 = vmatprep.subr.bf16.mxu0 0
    %1121 = vmatpush1.bf16.msra.mxu0 0
    %1122 = vmatprep.subr.bf16.mxu0 0
    %1123 = vmatpush1.bf16.msra.mxu0 0
    %1124 = vmatprep.subr.bf16.mxu0 0
    %1125 = vmatpush1.bf16.msra.mxu0 0
    %1126 = vmatprep.subr.bf16.mxu0 0
    %1127 = vmatpush1.bf16.msra.mxu0 0
    %1128 = vmatprep.subr.bf16.mxu0 0
    %1129 = vmatpush1.bf16.msra.mxu0 0
    %1130 = vmatprep.subr.bf16.mxu0 0
    %1131 = vmatpush1.bf16.msra.mxu0 0
    %1132 = vmatprep.subr.bf16.mxu0 0
    %1133 = vmatpush1.bf16.msra.mxu0 0
    %1134 = vmatprep.subr.bf16.mxu0 0
    %1135 = vmatpush1.bf16.msra.mxu0 0
    %1136 = vmatprep.mubr.bf16.mxu0 0
    %1137 = vmatmul.mubr.bf16.gmra.mrb[0].mxu0 %v1102
    %v1138 = vpop.f32.mrb[0].mxu0
    %v1139 = vadd.f32 0.0, %v1138
    %v1140 = vpop.f32.mrb[0].mxu0
    %v1141 = vpop.f32.mrb[0].mxu0
    %v1142 = vpop.f32.mrb[0].mxu0
    %1143 = vdwg.mxu0
    %v1144 = vadd.f32 %v1096, %v1139
    %v1145 = vmul.f32 %v1144, 0.5
    %v1146 = vtanh.pop %v1145
    %v1147 = vmul.f32 %v1146, 0.5
    %v1148 = vadd.f32 %v1147, 0.5
    %v1149 = vtanh.pop %v1144
    %v1150 = vmul.f32 %v1148, %v1084
    %1152 = vrot.lane.b32.xlu0 %v1149, 64
    %v1153 = vpop.permute.xlu0 %1152
    %v1155 = vmul.f32 %v1148, %v1153
    %1157 = vrot.lane.b32.xlu0 %v1155, 32
    %v1158 = vpop.permute.xlu0 %1157
    %v1160 = vadd.f32 %v1150, %v1158
    %v1161 = vtanh.pop %v1160
    %1163 = vrot.lane.b32.xlu0 %v1161, 64
    %v1164 = vpop.permute.xlu0 %1163
    %v1166 = vmul.f32 %v1148, %v1164
    %1168 = vrot.lane.b32.xlu0 %v1166, 32
    %v1169 = vpop.permute.xlu0 %1168
    %1171 = vst.msk [vmem:[#allocation4 + $0x28] sm:$0xff] %vm720, %v1169
    %v1172 = vld [vmem:[#allocation3 + $0x30] sm:$0xff]
    %v1173 = vpack.c.bf16 %v1166, %v1166
    %1175 = vrot.lane.b32.xlu0 %v1173, 32
    %v1176 = vpop.permute.xlu0 %1175
    %v1178 = vsel %vm720, %v1176, 0
    %1180 = vmatprep.subr.bf16.mxu0 0
    %1181 = vmatpush1.bf16.msra.mxu0 %v716
    %1182 = vmatprep.subr.bf16.mxu0 0
    %1183 = vmatpush1.bf16.msra.mxu0 %v717
    %1184 = vmatprep.subr.bf16.mxu0 0
    %1185 = vmatpush1.bf16.msra.mxu0 0
    %1186 = vmatprep.subr.bf16.mxu0 0
    %1187 = vmatpush1.bf16.msra.mxu0 0
    %1188 = vmatprep.subr.bf16.mxu0 0
    %1189 = vmatpush1.bf16.msra.mxu0 0
    %1190 = vmatprep.subr.bf16.mxu0 0
    %1191 = vmatpush1.bf16.msra.mxu0 0
    %1192 = vmatprep.subr.bf16.mxu0 0
    %1193 = vmatpush1.bf16.msra.mxu0 0
    %1194 = vmatprep.subr.bf16.mxu0 0
    %1195 = vmatpush1.bf16.msra.mxu0 0
    %1196 = vmatprep.subr.bf16.mxu0 0
    %1197 = vmatpush1.bf16.msra.mxu0 0
    %1198 = vmatprep.subr.bf16.mxu0 0
    %1199 = vmatpush1.bf16.msra.mxu0 0
    %1200 = vmatprep.subr.bf16.mxu0 0
    %1201 = vmatpush1.bf16.msra.mxu0 0
    %1202 = vmatprep.subr.bf16.mxu0 0
    %1203 = vmatpush1.bf16.msra.mxu0 0
    %1204 = vmatprep.subr.bf16.mxu0 0
    %1205 = vmatpush1.bf16.msra.mxu0 0
    %1206 = vmatprep.subr.bf16.mxu0 0
    %1207 = vmatpush1.bf16.msra.mxu0 0
    %1208 = vmatprep.subr.bf16.mxu0 0
    %1209 = vmatpush1.bf16.msra.mxu0 0
    %1210 = vmatprep.subr.bf16.mxu0 0
    %1211 = vmatpush1.bf16.msra.mxu0 0
    %1212 = vmatprep.mubr.bf16.mxu0 0
    %1213 = vmatmul.mubr.bf16.gmra.mrb[0].mxu0 %v1178
    %v1214 = vpop.f32.mrb[0].mxu0
    %v1215 = vadd.f32 0.0, %v1214
    %v1216 = vpop.f32.mrb[0].mxu0
    %v1217 = vpop.f32.mrb[0].mxu0
    %v1218 = vpop.f32.mrb[0].mxu0
    %1219 = vdwg.mxu0
    %v1220 = vadd.f32 %v1172, %v1215
    %v1221 = vmul.f32 %v1220, 0.5
    %v1222 = vtanh.pop %v1221
    %v1223 = vmul.f32 %v1222, 0.5
    %v1224 = vadd.f32 %v1223, 0.5
    %v1225 = vtanh.pop %v1220
    %v1226 = vmul.f32 %v1224, %v1160
    %1228 = vrot.lane.b32.xlu0 %v1225, 64
    %v1229 = vpop.permute.xlu0 %1228
    %v1231 = vmul.f32 %v1224, %v1229
    %1233 = vrot.lane.b32.xlu0 %v1231, 32
    %v1234 = vpop.permute.xlu0 %1233
    %v1236 = vadd.f32 %v1226, %v1234
    %v1237 = vtanh.pop %v1236
    %1239 = vrot.lane.b32.xlu0 %v1237, 64
    %v1240 = vpop.permute.xlu0 %1239
    %v1242 = vmul.f32 %v1224, %v1240
    %1244 = vrot.lane.b32.xlu0 %v1242, 32
    %v1245 = vpop.permute.xlu0 %1244
    %1247 = vst.msk [vmem:[#allocation4 + $0x30] sm:$0xff] %vm720, %v1245
    %v1248 = vld [vmem:[#allocation3 + $0x38] sm:$0xff]
    %v1249 = vpack.c.bf16 %v1242, %v1242
    %1251 = vrot.lane.b32.xlu0 %v1249, 32
    %v1252 = vpop.permute.xlu0 %1251
    %v1254 = vsel %vm720, %v1252, 0
    %1256 = vmatprep.subr.bf16.mxu0 0
    %1257 = vmatpush1.bf16.msra.mxu0 %v716
    %1258 = vmatprep.subr.bf16.mxu0 0
    %1259 = vmatpush1.bf16.msra.mxu0 %v717
    %1260 = vmatprep.subr.bf16.mxu0 0
    %1261 = vmatpush1.bf16.msra.mxu0 0
    %1262 = vmatprep.subr.bf16.mxu0 0
    %1263 = vmatpush1.bf16.msra.mxu0 0
    %1264 = vmatprep.subr.bf16.mxu0 0
    %1265 = vmatpush1.bf16.msra.mxu0 0
    %1266 = vmatprep.subr.bf16.mxu0 0
    %1267 = vmatpush1.bf16.msra.mxu0 0
    %1268 = vmatprep.subr.bf16.mxu0 0
    %1269 = vmatpush1.bf16.msra.mxu0 0
    %1270 = vmatprep.subr.bf16.mxu0 0
    %1271 = vmatpush1.bf16.msra.mxu0 0
    %1272 = vmatprep.subr.bf16.mxu0 0
    %1273 = vmatpush1.bf16.msra.mxu0 0
    %1274 = vmatprep.subr.bf16.mxu0 0
    %1275 = vmatpush1.bf16.msra.mxu0 0
    %1276 = vmatprep.subr.bf16.mxu0 0
    %1277 = vmatpush1.bf16.msra.mxu0 0
    %1278 = vmatprep.subr.bf16.mxu0 0
    %1279 = vmatpush1.bf16.msra.mxu0 0
    %1280 = vmatprep.subr.bf16.mxu0 0
    %1281 = vmatpush1.bf16.msra.mxu0 0
    %1282 = vmatprep.subr.bf16.mxu0 0
    %1283 = vmatpush1.bf16.msra.mxu0 0
    %1284 = vmatprep.subr.bf16.mxu0 0
    %1285 = vmatpush1.bf16.msra.mxu0 0
    %1286 = vmatprep.subr.bf16.mxu0 0
    %1287 = vmatpush1.bf16.msra.mxu0 0
    %1288 = vmatprep.mubr.bf16.mxu0 0
    %1289 = vmatmul.mubr.bf16.gmra.mrb[0].mxu0 %v1254
    %v1290 = vpop.f32.mrb[0].mxu0
    %v1291 = vadd.f32 0.0, %v1290
    %v1292 = vpop.f32.mrb[0].mxu0
    %v1293 = vpop.f32.mrb[0].mxu0
    %v1294 = vpop.f32.mrb[0].mxu0
    %1295 = vdwg.mxu0
    %v1296 = vadd.f32 %v1248, %v1291
    %v1297 = vmul.f32 %v1296, 0.5
    %v1298 = vtanh.pop %v1297
    %v1299 = vmul.f32 %v1298, 0.5
    %v1300 = vadd.f32 %v1299, 0.5
    %v1301 = vtanh.pop %v1296
    %v1302 = vmul.f32 %v1300, %v1236
    %1304 = vrot.lane.b32.xlu0 %v1301, 64
    %v1305 = vpop.permute.xlu0 %1304
    %v1307 = vmul.f32 %v1300, %v1305
    %1309 = vrot.lane.b32.xlu0 %v1307, 32
    %v1310 = vpop.permute.xlu0 %1309
    %v1312 = vadd.f32 %v1302, %v1310
    %v1313 = vtanh.pop %v1312
    %1315 = vrot.lane.b32.xlu0 %v1313, 64
    %v1316 = vpop.permute.xlu0 %1315
    %v1318 = vmul.f32 %v1300, %v1316
    %1320 = vrot.lane.b32.xlu0 %v1318, 32
    %v1321 = vpop.permute.xlu0 %1320
    %1323 = vst.msk [vmem:[#allocation4 + $0x38] sm:$0xff] %vm720, %v1321
    %v1324 = vld [vmem:[#allocation4] sm:$0xff]
    %v1325 = vld [vmem:[#allocation4 + $0x8] sm:$0xff]
    %v1326 = vld [vmem:[#allocation4 + $0x10] sm:$0xff]
    %v1327 = vld [vmem:[#allocation4 + $0x18] sm:$0xff]
    %v1328 = vld [vmem:[#allocation4 + $0x20] sm:$0xff]
    %v1329 = vld [vmem:[#allocation4 + $0x28] sm:$0xff]
    %v1330 = vld [vmem:[#allocation4 + $0x30] sm:$0xff]
    %v1331 = vld [vmem:[#allocation4 + $0x38] sm:$0xff]
    %v1332 = vpack.c.bf16 %v1325, %v1324
    %v1333 = vpack.c.bf16 %v1327, %v1326
    %v1334 = vpack.c.bf16 %v1329, %v1328
    %v1335 = vpack.c.bf16 %v1331, %v1330
    %v1336 = vld [vmem:[#allocation12] sm:$0xf]
    %v1337 = vld [vmem:[#allocation12 + $0x4] sm:$0xf]
    %v1338 = vld [vmem:[#allocation12 + $0x8] sm:$0xf]
    %v1339 = vld [vmem:[#allocation12 + $0xc] sm:$0xf]
    %v1340 = vld [vmem:[%s6] sm:$0x1]
    %v1342 = vlaneseq
    %v1343 = vshrl.u32 %v1342, 7
    %v1344 = vsub.s32 0, %v1343
    %v1345 = vrot.slane %v1340, %v1344
    %v1351 = vunpack.c.l.b16 %v1336
    %v1352 = vunpack.c.l.b16 %v1337
    %v1353 = vunpack.c.l.b16 %v1338
    %v1354 = vunpack.c.l.b16 %v1339
    %v1355 = vpack.c.b16 %v1352, %v1351
    %v1356 = vpack.c.b16 %v1354, %v1353
    %v1360 = vsel %vm720, %v1332, 0
    %v1363 = vsel %vm720, %v1333, 0
    %v1366 = vsel %vm720, %v1334, 0
    %v1369 = vsel %vm720, %v1335, 0
    %1371 = vmatprep.subr.bf16.mxu0 0
    %1372 = vmatpush1.bf16.msra.mxu0 %v1355
    %1373 = vmatprep.subr.bf16.mxu0 0
    %1374 = vmatpush1.bf16.msra.mxu0 %v1356
    %1375 = vmatprep.subr.bf16.mxu0 0
    %1376 = vmatpush1.bf16.msra.mxu0 0
    %1377 = vmatprep.subr.bf16.mxu0 0
    %1378 = vmatpush1.bf16.msra.mxu0 0
    %1379 = vmatprep.subr.bf16.mxu0 0
    %1380 = vmatpush1.bf16.msra.mxu0 0
    %1381 = vmatprep.subr.bf16.mxu0 0
    %1382 = vmatpush1.bf16.msra.mxu0 0
    %1383 = vmatprep.subr.bf16.mxu0 0
    %1384 = vmatpush1.bf16.msra.mxu0 0
    %1385 = vmatprep.subr.bf16.mxu0 0
    %1386 = vmatpush1.bf16.msra.mxu0 0
    %1387 = vmatprep.subr.bf16.mxu0 0
    %1388 = vmatpush1.bf16.msra.mxu0 0
    %1389 = vmatprep.subr.bf16.mxu0 0
    %1390 = vmatpush1.bf16.msra.mxu0 0
    %1391 = vmatprep.subr.bf16.mxu0 0
    %1392 = vmatpush1.bf16.msra.mxu0 0
    %1393 = vmatprep.subr.bf16.mxu0 0
    %1394 = vmatpush1.bf16.msra.mxu0 0
    %1395 = vmatprep.subr.bf16.mxu0 0
    %1396 = vmatpush1.bf16.msra.mxu0 0
    %1397 = vmatprep.subr.bf16.mxu0 0
    %1398 = vmatpush1.bf16.msra.mxu0 0
    %1399 = vmatprep.subr.bf16.mxu0 0
    %1400 = vmatpush1.bf16.msra.mxu0 0
    %1401 = vmatprep.subr.bf16.mxu0 0
    %1402 = vmatpush1.bf16.msra.mxu0 0
    %1403 = vmatprep.mubr.bf16.mxu0 0
    %1404 = vmatmul.mubr.bf16.gmra.mrb[0].mxu0 %v1360
    %v1405 = vpop.f32.mrb[0].mxu0
    %v1406 = vadd.f32 %v1345, %v1405
    %v1407 = vpop.f32.mrb[0].mxu0
    %v1408 = vpop.f32.mrb[0].mxu0
    %v1409 = vadd.f32 %v1345, %v1408
    %v1410 = vpop.f32.mrb[0].mxu0
    %1411 = vmatprep.mubr.bf16.mxu0 0
    %1412 = vmatmul.mubr.bf16.gmra.mrb[0].mxu0 %v1363
    %v1413 = vpop.f32.mrb[0].mxu0
    %v1414 = vadd.f32 %v1345, %v1413
    %v1415 = vpop.f32.mrb[0].mxu0
    %v1416 = vpop.f32.mrb[0].mxu0
    %v1417 = vadd.f32 %v1345, %v1416
    %v1418 = vpop.f32.mrb[0].mxu0
    %1419 = vmatprep.mubr.bf16.mxu0 0
    %1420 = vmatmul.mubr.bf16.gmra.mrb[0].mxu0 %v1366
    %v1421 = vpop.f32.mrb[0].mxu0
    %v1422 = vadd.f32 %v1345, %v1421
    %v1423 = vpop.f32.mrb[0].mxu0
    %v1424 = vpop.f32.mrb[0].mxu0
    %v1425 = vadd.f32 %v1345, %v1424
    %v1426 = vpop.f32.mrb[0].mxu0
    %1427 = vmatprep.mubr.bf16.mxu0 0
    %1428 = vmatmul.mubr.bf16.gmra.mrb[0].mxu0 %v1369
    %v1429 = vpop.f32.mrb[0].mxu0
    %v1430 = vadd.f32 %v1345, %v1429
    %v1431 = vpop.f32.mrb[0].mxu0
    %v1432 = vpop.f32.mrb[0].mxu0
    %v1433 = vadd.f32 %v1345, %v1432
    %v1434 = vpop.f32.mrb[0].mxu0
    %1435 = vdwg.mxu0
    %1436 = vst [vmem:[%s7] sm:$0xff] %v1406
    %1437 = vst [vmem:[%s7 + $0x8] sm:$0xff] %v1409
    %1438 = vst [vmem:[%s7 + $0x10] sm:$0xff] %v1414
    %1439 = vst [vmem:[%s7 + $0x18] sm:$0xff] %v1417
    %1440 = vst [vmem:[%s7 + $0x20] sm:$0xff] %v1422
    %1441 = vst [vmem:[%s7 + $0x28] sm:$0xff] %v1425
    %1442 = vst [vmem:[%s7 + $0x30] sm:$0xff] %v1430
    %1443 = vst [vmem:[%s7 + $0x38] sm:$0xff] %v1433
    // Predicated region
    $region50: #{lstm_forward.1} parent=1 // pred_check
      _
    $region51: #{lstm_forward.1} parent=1 // pred_check_branch
      %1445 = sbr.rel (0) target = $region53
    $region52: #{lstm_forward.1} parent=1 // pred_region
      _
    $region53: #{lstm_forward.1} parent=1 // pred_fallthru
      _
    // Predicated region
    $region54: #{lstm_forward.1} parent=1 // pred_check
      _
    $region55: #{lstm_forward.1} parent=1 // pred_check_branch
      %1447 = sbr.rel (0) target = $region57
    $region56: #{lstm_forward.1} parent=1 // pred_region
      _
    $region57: #{lstm_forward.1} parent=1 // pred_fallthru
      _
    %1448 = vsyncpa [#allocation6], 1
    %1449 = vsyncpa [#allocation10], 1
    %1450 = vsyncpa [#allocation13], 1
    %1451 = vsyncpa [#allocation7], 1

</llo_original>
